<compile_context>
chip_gen: v5e
topology: v5e:2x2
jax: 0.10.0
libtpu: 0.0.40
codegen_flags: <defaults>
</compile_context>

<pallas_src>
import functools

import jax
import jax.numpy as jnp
from jax.experimental import pallas as pl
from jax.experimental.pallas import tpu as pltpu

# MetricClassifier / MetricModel constants
SCORE_LO = 25.780681610107422
SCORE_HI = 83.22696685791016
DIAP = SCORE_HI - SCORE_LO
N_BINS = 10
# checkpoint['k'][0], checkpoint['b'][0] -- synthetic deterministic values (no .pth load)
K_SCALE = 30.0
B_OFFSET = 54.5

_vmem_limit_cache = None


def _vmem_limit_bytes():
    """Generation-aware VMEM limit: ~3/4 of physical capacity, capped at 96 MiB.

    128 MiB (v5e/v6e) -> 96 MiB ; 64 MiB per-TC (v7x) -> 48 MiB.
    """
    global _vmem_limit_cache
    if _vmem_limit_cache is None:
        cap = 64 * 1024 * 1024  # conservative default (v7x per-TC physical)
        try:
            info = pltpu.get_tpu_info()
            cap = int(getattr(info, "vmem_capacity_bytes", cap)) or cap
        except Exception:
            pass
        _vmem_limit_cache = int(min(cap * 3 // 4, 96 * 1024 * 1024))
    return _vmem_limit_cache


# ---------------------------------------------------------------------------
# Pallas kernels
# ---------------------------------------------------------------------------
def _embed_gap_kernel(x_ref, w_ref, b_ref, *out_refs,
                      batch, rows_per_batch, emit_full):
    """y = relu(x @ w + b) with SPSP(P=1,'avg') GAP fused into the epilogue.

    Grid = (N tiles,), all "parallel" (K is whole in the block, M is whole in the
    block).  x/w are bf16 (MXU native); bias add / ReLU / GAP in f32.
    Outputs: optional full feature map (bf16) + per-batch pooled features (f32).
    """
    if emit_full:
        o_ref, pool_ref = out_refs
    else:
        (pool_ref,) = out_refs

    y = jnp.dot(x_ref[...], w_ref[...], preferred_element_type=jnp.float32)
    y = jnp.maximum(y + b_ref[...], 0.0)

    if emit_full:
        o_ref[...] = y.astype(o_ref.dtype)

    # Global average pool over the spatial rows of each batch element (static unroll).
    inv = 1.0 / rows_per_batch
    for bi in range(batch):
        pool_ref[bi:bi + 1, :] = (
            jnp.sum(y[bi * rows_per_batch:(bi + 1) * rows_per_batch, :],
                    axis=0, keepdims=True) * inv)


def _head_kernel(x6_ref, x7_ref,
                 d6w1, d6b1, d6w2, d6b2, d6w3, d6b3,
                 d7w1, d7b1, d7w2, d7b2, d7w3, d7b3,
                 r6w, r6b, r7w, r7b,
                 regw6, regw7, regb,
                 cls_ref, pq6_ref, pq7_ref,
                 *, k_scale, b_off, lo, d, n_bins):
    """Fused post-GAP head (single launch, no grid, all weights VMEM-resident):

    dr6/dr7 (3x folded Linear+BN, ReLU at end) -> regr6/regr7 -> regression(concat)
    -> score*k+b -> exact MetricClassifier bucketisation.
    """
    def dr(x, w1, b1, w2, b2, w3, b3):
        # weights are bf16; activations down-cast only at the MXU input,
        # bias add / ReLU stay in f32 (v5e has no bf16 VPU path).
        h = jnp.dot(x.astype(jnp.bfloat16), w1[...],
                    preferred_element_type=jnp.float32) + b1[...]
        h = jnp.dot(h.astype(jnp.bfloat16), w2[...],
                    preferred_element_type=jnp.float32) + b2[...]
        h = jnp.dot(h.astype(jnp.bfloat16), w3[...],
                    preferred_element_type=jnp.float32) + b3[...]
        return jnp.maximum(h, 0.0)

    x6h = dr(x6_ref[...], d6w1, d6b1, d6w2, d6b2, d6w3, d6b3)   # (B, 64)
    x7h = dr(x7_ref[...], d7w1, d7b1, d7w2, d7b2, d7w3, d7b3)   # (B, 64)

    # per-branch regressors (pq[0], pq[1]); unused by the classifier output but
    # computed + emitted for fidelity with IQAModel.forward.
    pq6_ref[...] = jnp.dot(x6h, r6w[...], preferred_element_type=jnp.float32) + r6b[...]
    pq7_ref[...] = jnp.dot(x7h, r7w[...], preferred_element_type=jnp.float32) + r7b[...]

    # regression on concat(x6h, x7h): split-weight form avoids an in-kernel concat.
    s = (jnp.dot(x6h, regw6[...], preferred_element_type=jnp.float32)
         + jnp.dot(x7h, regw7[...], preferred_element_type=jnp.float32)
         + regb[...])                                            # (B, 1)

    # score = raw * k + b ; then the exact MetricClassifier binning loop
    score = s * k_scale + b_off
    count = jnp.zeros(score.shape, jnp.int32)
    for i in range(n_bins):                                      # unrolled at trace time
        count = count + (score > (lo + i * d)).astype(jnp.int32)
    # score <= lo -> 0 ; score in bin i -> i ; beyond last edge -> n_bins + 1
    cls_ref[...] = jnp.where(score > lo + n_bins * d, n_bins + 1, count).astype(jnp.int32)


# ---------------------------------------------------------------------------
# Pallas wrappers
# ---------------------------------------------------------------------------
def pallas_embed_gap(x, w, b, *, batch, tn=None, emit_full=True,
                     out_dtype=jnp.bfloat16):
    """relu(x @ w + b) + fused per-batch GAP.  K whole, N tiled on a parallel axis."""
    m, k_dim = x.shape
    k2, n = w.shape
    assert k_dim == k2
    assert m % batch == 0
    rows_per_batch = m // batch
    if tn is None:
        tn = n
    assert n % tn == 0
    grid = (n // tn,)
    b2 = b.reshape(1, n).astype(jnp.float32)

    out_shape = []
    out_specs = []
    if emit_full:
        out_shape.append(jax.ShapeDtypeStruct((m, n), out_dtype))
        out_specs.append(pl.BlockSpec((m, tn), lambda j: (0, j)))
    out_shape.append(jax.ShapeDtypeStruct((batch, n), jnp.float32))
    out_specs.append(pl.BlockSpec((batch, tn), lambda j: (0, j)))

    return pl.pallas_call(
        functools.partial(_embed_gap_kernel, batch=batch,
                          rows_per_batch=rows_per_batch, emit_full=emit_full),
        out_shape=tuple(out_shape),
        grid=grid,
        in_specs=[
            pl.BlockSpec((m, k_dim), lambda j: (0, 0)),
            pl.BlockSpec((k_dim, tn), lambda j: (0, j)),
            pl.BlockSpec((1, tn), lambda j: (0, j)),
        ],
        out_specs=tuple(out_specs),
        compiler_params=pltpu.CompilerParams(
            dimension_semantics=("parallel",),
            vmem_limit_bytes=_vmem_limit_bytes()),
    )(x, w, b2)


def pallas_head(params, x6, x7):
    """Single fused pallas_call (no grid -> single-buffered VMEM) for the head."""
    bsz = x6.shape[0]
    inputs = [
        x6, x7,
        params["dr6_w1"], params["dr6_b1"], params["dr6_w2"], params["dr6_b2"],
        params["dr6_w3"], params["dr6_b3"],
        params["dr7_w1"], params["dr7_b1"], params["dr7_w2"], params["dr7_b2"],
        params["dr7_w3"], params["dr7_b3"],
        params["regr6_w"], params["regr6_b"],
        params["regr7_w"], params["regr7_b"],
        params["regression_w6"], params["regression_w7"], params["regression_b"],
    ]
    out_shape = (
        jax.ShapeDtypeStruct((bsz, 1), jnp.int32),    # class ids
        jax.ShapeDtypeStruct((bsz, 1), jnp.float32),  # pq[0]
        jax.ShapeDtypeStruct((bsz, 1), jnp.float32),  # pq[1]
    )
    return pl.pallas_call(
        functools.partial(_head_kernel, k_scale=K_SCALE, b_off=B_OFFSET,
                          lo=SCORE_LO, d=DIAP / N_BINS, n_bins=N_BINS),
        out_shape=out_shape,
        in_specs=[pl.BlockSpec(memory_space=pltpu.MemorySpace.VMEM)] * len(inputs),
        out_specs=(pl.BlockSpec(memory_space=pltpu.MemorySpace.VMEM),) * 3,
        compiler_params=pltpu.CompilerParams(
            vmem_limit_bytes=_vmem_limit_bytes()),
    )(*inputs)


# ---------------------------------------------------------------------------
# Deterministic synthetic parameters (glue)
# ---------------------------------------------------------------------------
def fold_bn(w, b, gamma, beta, mean, var, eps=1e-5):
    # eval-mode BatchNorm1d folded into the preceding Linear
    scale = gamma / jnp.sqrt(var + eps)
    return w * scale[None, :], (b - mean) * scale + beta


def init_params(seed=0):
    key = jax.random.PRNGKey(seed)

    def nxt():
        nonlocal key
        key, sub = jax.random.split(key)
        return sub

    def lin(fan_in, fan_out, scale=0.02):
        w = scale * jax.random.normal(nxt(), (fan_in, fan_out), jnp.float32)
        b = scale * jax.random.normal(nxt(), (fan_out,), jnp.float32)
        return w, b

    def bn(n):
        gamma = 1.0 + 0.01 * jax.random.normal(nxt(), (n,), jnp.float32)
        beta = 0.01 * jax.random.normal(nxt(), (n,), jnp.float32)
        mean = 0.01 * jax.random.normal(nxt(), (n,), jnp.float32)
        var = 1.0 + 0.1 * jnp.abs(jax.random.normal(nxt(), (n,), jnp.float32))
        return gamma, beta, mean, var

    p = {}

    # synthetic backbone stand-in (see TODO at top)
    p6 = 16
    w6, b6 = lin(3 * p6 * p6, 1024)
    # Fold transforms.Normalize([0.485,0.456,0.406],[0.229,0.224,0.225]) into the
    # first weight: y = ((x - m) / std) @ W + b  ==  x @ (W/std) + (b - (m/std) @ W).
    # Patch feature ordering is (channel, row-in-patch, col-in-patch).
    mean_c = jnp.array([0.485, 0.456, 0.406], jnp.float32)
    std_c = jnp.array([0.229, 0.224, 0.225], jnp.float32)
    inv_std_vec = jnp.repeat(1.0 / std_c, p6 * p6)       # (768,)
    mean_vec = jnp.repeat(mean_c, p6 * p6)               # (768,)
    w6_folded = w6 * inv_std_vec[:, None]
    b6_folded = b6 - (mean_vec * inv_std_vec) @ w6
    p["w_embed6"] = w6_folded.astype(jnp.bfloat16)
    p["b_embed6"] = b6_folded

    w7, b7 = lin(4 * 1024, 2048)
    p["w_embed7"] = w7.astype(jnp.bfloat16)
    p["b_embed7"] = b7

    def dr_params(pre, fin):
        dims = [(fin, 1024), (1024, 256), (256, 64)]
        for i, (a, c) in enumerate(dims, start=1):
            w, b = lin(a, c)
            g, bt, m, v = bn(c)
            wf, bf = fold_bn(w, b, g, bt, m, v)
            p[f"{pre}_w{i}"] = wf.astype(jnp.bfloat16)   # weight streamed as bf16
            p[f"{pre}_b{i}"] = bf.reshape(1, c)          # bias stays f32

    dr_params("dr6", 1024)
    dr_params("dr7", 2048)

    rw6, rb6 = lin(64, 1)
    rw7, rb7 = lin(64, 1)
    p["regr6_w"], p["regr6_b"] = rw6, rb6.reshape(1, 1)
    p["regr7_w"], p["regr7_b"] = rw7, rb7.reshape(1, 1)

    regw, regb = lin(128, 1)
    # split regression weight so the fused head avoids an in-kernel concat
    p["regression_w6"] = regw[:64, :]
    p["regression_w7"] = regw[64:, :]
    p["regression_b"] = regb.reshape(1, 1)
    return p


# ---------------------------------------------------------------------------
# MetricClassifier forward
# ---------------------------------------------------------------------------
def metric_classifier_forward(params, x):
    b, c, h, w = x.shape

    # 1) ImageNet normalization is folded into w_embed6/b_embed6 (no separate kernel).

    # 2) backbone feature maps (stand-in for resnext101 layer3 / layer4 outputs),
    #    each with the SPSP(P=1,'avg') GAP fused into the kernel epilogue.
    p6 = 16
    h6, w6 = h // p6, w // p6
    patches6 = (x.reshape(b, c, h6, p6, w6, p6)
                 .transpose(0, 2, 4, 1, 3, 5)
                 .reshape(b * h6 * w6, c * p6 * p6)).astype(jnp.bfloat16)
    # f6 emitted in bf16 (its only consumers are the bf16 embed-7 matmul + in-kernel GAP);
    # tn=512 gives a 2-wide parallel N grid so both v7x TensorCores are used.
    f6, pooled6 = pallas_embed_gap(patches6, params["w_embed6"], params["b_embed6"],
                                   batch=b, tn=512, emit_full=True,
                                   out_dtype=jnp.bfloat16)
    # f6: (B*h6*w6, 1024) bf16 ; pooled6: (B, 1024) f32

    p7 = 2
    h7, w7 = h6 // p7, w6 // p7
    # TODO(synk): fold this space-to-depth into embed7's BlockSpec (K grid keyed by
    # spatial parity) to remove this f6-sized transpose round trip.
    patches7 = (f6.reshape(b, h7, p7, w7, p7, 1024)
                  .transpose(0, 1, 3, 2, 4, 5)
                  .reshape(b * h7 * w7, p7 * p7 * 1024))   # already bf16
    # f7 is consumed only by the GAP -> never materialize the full 2048-ch map.
    outs7 = pallas_embed_gap(patches7, params["w_embed7"], params["b_embed7"],
                             batch=b, tn=1024, emit_full=False)
    pooled7 = outs7[0]                                     # (B, 2048) f32

    # 3-5) single fused head kernel: dr6/dr7 + regr6/regr7 + regression
    #      + score*k+b + bucketisation.
    cls, _pq6, _pq7 = pallas_head(params, pooled6, pooled7)

    # torch returns int64 of shape (B,); int32 used here (TPU / no x64)
    return cls.reshape(b)


if __name__ == "__main__":
    B, C, H, W = 2, 3, 32, 32
    key = jax.random.PRNGKey(0)
    x = jax.random.uniform(key, (B, C, H, W), dtype=jnp.float32)  # image in [0, 1]

    params = init_params(seed=0)
    out = metric_classifier_forward(params, x)
    out = jax.block_until_ready(out)

    assert out.shape == (B,)
    assert out.dtype == jnp.int32
    print("KERNEL_OK")
</pallas_src>

<mosaic_0001>
module attributes {stable_mosaic.version = 11 : i64} {
  func.func @_embed_gap_kernel(%arg0: i32, %arg1: memref<8x768xbf16, #tpu.memory_space<vmem>>, %arg2: memref<768x512xbf16, #tpu.memory_space<vmem>>, %arg3: memref<1x512xf32, #tpu.memory_space<vmem>>, %arg4: memref<8x512xbf16, #tpu.memory_space<vmem>>, %arg5: memref<2x512xf32, #tpu.memory_space<vmem>>) attributes {dimension_semantics = [#tpu.dimension_semantics<parallel>], iteration_bounds = array<i64: 2>, scalar_prefetch = 0 : i64, scratch_operands = 0 : i64, tpu.core_type = #tpu.core_type<tc>, window_params = [{pipeline_mode = #tpu.pipeline_mode<synchronous>, transform_indices = @transform_0, window_bounds = array<i64: 8, 768>}, {transform_indices = @transform_1, window_bounds = array<i64: 768, 512>}, {transform_indices = @transform_2, window_bounds = array<i64: 1, 512>}, {transform_indices = @transform_3, window_bounds = array<i64: 8, 512>}, {transform_indices = @transform_4, window_bounds = array<i64: 2, 512>}]} {
    %c0 = arith.constant 0 : index
    %c0_0 = arith.constant 0 : index
    %0 = vector.load %arg1[%c0, %c0_0] : memref<8x768xbf16, #tpu.memory_space<vmem>>, vector<8x768xbf16>
    %c0_1 = arith.constant 0 : index
    %c0_2 = arith.constant 0 : index
    %1 = vector.load %arg2[%c0_1, %c0_2] : memref<768x512xbf16, #tpu.memory_space<vmem>>, vector<768x512xbf16>
    %cst = arith.constant dense<0.000000e+00> : vector<8x512xf32>
    %2 = tpu.matmul %0, %1, %cst {dimension_numbers = #tpu.dot_dimension_numbers<[1], [0], [0], [1], [0, 0, 1, 1], [], []>} : vector<8x768xbf16>, vector<768x512xbf16>, vector<8x512xf32> -> vector<8x512xf32>
    %c0_3 = arith.constant 0 : index
    %c0_4 = arith.constant 0 : index
    %3 = vector.load %arg3[%c0_3, %c0_4] : memref<1x512xf32, #tpu.memory_space<vmem>>, vector<1x512xf32>
    %4 = vector.broadcast %3 : vector<1x512xf32> to vector<8x512xf32>
    %5 = arith.addf %2, %4 : vector<8x512xf32>
    %cst_5 = arith.constant 0.000000e+00 : f32
    %6 = vector.broadcast %cst_5 : f32 to vector<8x512xf32>
    %7 = arith.maximumf %5, %6 : vector<8x512xf32>
    %8 = arith.truncf %7 : vector<8x512xf32> to vector<8x512xbf16>
    %c0_6 = arith.constant 0 : index
    %c0_7 = arith.constant 0 : index
    %9 = vector.load %arg4[%c0_6, %c0_7] : memref<8x512xbf16, #tpu.memory_space<vmem>>, vector<8x512xbf16>
    tpu.vector_store %arg4[%c0_6, %c0_7], %8 {strides = array<i32>} : memref<8x512xbf16, #tpu.memory_space<vmem>>, vector<8x512xbf16>,
    %10 = vector.extract_strided_slice %7 {offsets = [0, 0], sizes = [4, 512], strides = [1, 1]} : vector<8x512xf32> to vector<4x512xf32>
    %cst_8 = arith.constant dense<0.000000e+00> : vector<512xf32>
    %11 = vector.multi_reduction <add>, %10, %cst_8 [0] : vector<4x512xf32> to vector<512xf32>
    %12 = vector.shape_cast %11 : vector<512xf32> to vector<1x512xf32>
    %cst_9 = arith.constant 2.500000e-01 : f32
    %13 = vector.broadcast %cst_9 : f32 to vector<1x512xf32>
    %14 = arith.mulf %12, %13 : vector<1x512xf32>
    %c0_10 = arith.constant 0 : index
    %c0_11 = arith.constant 0 : index
    %15 = vector.load %arg5[%c0_10, %c0_11] : memref<2x512xf32, #tpu.memory_space<vmem>>, vector<1x512xf32>
    tpu.vector_store %arg5[%c0_10, %c0_11], %14 {strides = array<i32>} : memref<2x512xf32, #tpu.memory_space<vmem>>, vector<1x512xf32>,
    %16 = vector.extract_strided_slice %7 {offsets = [4, 0], sizes = [4, 512], strides = [1, 1]} : vector<8x512xf32> to vector<4x512xf32>
    %cst_12 = arith.constant dense<0.000000e+00> : vector<512xf32>
    %17 = vector.multi_reduction <add>, %16, %cst_12 [0] : vector<4x512xf32> to vector<512xf32>
    %18 = vector.shape_cast %17 : vector<512xf32> to vector<1x512xf32>
    %cst_13 = arith.constant 2.500000e-01 : f32
    %19 = vector.broadcast %cst_13 : f32 to vector<1x512xf32>
    %20 = arith.mulf %18, %19 : vector<1x512xf32>
    %c1 = arith.constant 1 : index
    %c0_14 = arith.constant 0 : index
    %21 = vector.load %arg5[%c1, %c0_14] : memref<2x512xf32, #tpu.memory_space<vmem>>, vector<1x512xf32>
    tpu.vector_store %arg5[%c1, %c0_14], %20 {strides = array<i32>} : memref<2x512xf32, #tpu.memory_space<vmem>>, vector<1x512xf32>,
    return
  }
  func.func @transform_0(%arg0: i32) -> (i32, i32) {
    %c0_i32 = arith.constant 0 : i32
    %c0_i32_0 = arith.constant 0 : i32
    %c0_i32_1 = arith.constant 0 : i32
    return %c0_i32, %c0_i32_0 : i32, i32
  }
  func.func @transform_1(%arg0: i32) -> (i32, i32) {
    %c0_i32 = arith.constant 0 : i32
    %c0_i32_0 = arith.constant 0 : i32
    return %c0_i32, %arg0 : i32, i32
  }
  func.func @transform_2(%arg0: i32) -> (i32, i32) {
    %c0_i32 = arith.constant 0 : i32
    %c0_i32_0 = arith.constant 0 : i32
    return %c0_i32, %arg0 : i32, i32
  }
  func.func @transform_3(%arg0: i32) -> (i32, i32) {
    %c0_i32 = arith.constant 0 : i32
    %c0_i32_0 = arith.constant 0 : i32
    return %c0_i32, %arg0 : i32, i32
  }
  func.func @transform_4(%arg0: i32) -> (i32, i32) {
    %c0_i32 = arith.constant 0 : i32
    %c0_i32_0 = arith.constant 0 : i32
    return %c0_i32, %arg0 : i32, i32
  }
}

</mosaic_0001>

<llo_original>
// kernel: tpu_custom_call.1
$region0: #{tpu_custom_call.1}
  #allocation0 [shape = 'u32[]', space=smem, size = 0x4, offset = 0x4, fixed_abs, tag = 'smem constant byte address 0x4 - core index']
  #allocation1 [shape = 'u32[72,128]{1,0:T(1,128)}', space=vmem, size = 0x9000, scoped, tag = 'internal scratch']
  %s0 = inlined_call_operand.hbm [shape: bf16[8,768], index: 0, kind: input, shape index: {}]
  %s1 = inlined_call_operand.hbm [shape: bf16[768,1024], index: 1, kind: input, shape index: {}]
  %s2 = inlined_call_operand.hbm [shape: f32[1,1024], index: 2, kind: input, shape index: {}]
  %s3 = inlined_call_operand.hbm [shape: bf16[8,1024], index: 3, kind: output, shape index: {0}]
  %s4 = inlined_call_operand.hbm [shape: f32[2,1024], index: 4, kind: output, shape index: {1}]
  %5 = xla_tuple %s3, %s4
  %s6 = sld [smem:[#allocation0]]
  $region65: #{tpu_custom_call.1} parent=0
    _
  %s8 = ssub.s32 1, %s6
  %s9 = scalar_select 0, %s8, %s6
  $region1: #{tpu_custom_call.1} parent=0
    #allocation2 [shape = 'u8[12288]{0}', space=vmem, size = 0x3000, scoped, tag = 'input window, operand 0, single buffered']
    #allocation3 [shape = 's32[2]{0}', space=sflag, size = 0x8, scoped, tag = 'scoped memory for tpu_custom_call.1']
    #allocation4 [shape = 's32[2]{0}', space=sflag, size = 0x8, scoped, tag = 'scoped memory for tpu_custom_call.1']
    #allocation5 [shape = 'u8[1572864]{0}', space=vmem, size = 0x180000, scoped, tag = 'input window, operand 1']
    #allocation6 [shape = 's32[2]{0}', space=sflag, size = 0x8, scoped, tag = 'scoped memory for tpu_custom_call.1']
    #allocation7 [shape = 'u8[4096]{0}', space=vmem, size = 0x1000, scoped, tag = 'input window, operand 2']
    #allocation8 [shape = 'u8[16384]{0}', space=vmem, size = 0x4000, scoped, tag = 'output window, operand 0']
    #allocation9 [shape = 'u8[8192]{0}', space=vmem, size = 0x2000, scoped, tag = 'output window, operand 1']
    #allocation10 [shape = 's32[2]{0}', space=sflag, size = 0x8, scoped, tag = 'scoped memory for tpu_custom_call.1']
    %10 = vsyncpa [#allocation3], 0
    %11 = vsyncpa [#allocation6], 0
    %s12 = scalar_lea.sflag [#allocation6], 1
    %13 = vsyncpa %s12, 0
    %14 = vsyncpa [#allocation4], 0
    %s15 = scalar_lea.sflag [#allocation4], 1
    %16 = vsyncpa %s15, 0
    %17 = vsyncpa [#allocation10], 0
    %s18 = scalar_lea.sflag [#allocation10], 1
    %19 = vsyncpa %s18, 0
    loop: start=0, step=1, limit=4
    $region2: #{tpu_custom_call.1} parent=1 // loop_pre_header
      _
    $region3: #{tpu_custom_call.1} parent=1 // loop_header
      %s21 = sphi 0, %s25
      %p22 = scmp.ge.s32.totalorder %s21, 4
      %s29 = sphi 0, %s29
      %s31 = sphi 0, %s29
      %s32 = sphi 0, %s31
      %s46 = sphi 0, %s32
      %s52 = sphi 0, %s54
      %s55 = sphi 0, %s52
      %s56 = sphi 0, %s55
      %s72 = sphi 0, %s56
      %s78 = sphi 0, %s80
      %s81 = sphi 0, %s78
      %s82 = sphi 0, %s81
      %s98 = sphi 0, %s82
      %s104 = sphi 0, %s106
      %s107 = sphi 0, %s104
      %s108 = sphi 0, %s107
      %s124 = sphi 0, %s108
      %s130 = sphi 0, %s132
      %s133 = sphi 0, %s130
      %s134 = sphi 0, %s133
      %s150 = sphi 0, %s134
    $region4: #{tpu_custom_call.1} parent=1 // loop_header_branch
      %24 = sbr.rel (%p22) target = $region8
    $region5: #{tpu_custom_call.1} parent=1 // loop_body
      %s26 = ssub.s32 %s21, 1
      %s27 = ssub.s32 %s21, 2
      %s28 = sadd.s32 %s21, 1
      %s30 = sadd.s32 %s29, 1
      %p33 = scmp.eq.s32.totalorder %s21, 1
      %p34 = scmp.ne.s32.totalorder %s29, %s31
      %p35 = scmp.eq.s32.totalorder %s21, 0
      %p36 = por %p34, %p35
      %p37 = scmp.ne.s32.totalorder %s29, %s31
      %p38 = scmp.eq.s32.totalorder %s26, 1
      %p39 = por %p37, %p38
      %p40 = scmp.ne.s32.totalorder %s31, %s32
      %p41 = scmp.eq.s32.totalorder %s26, 0
      %p42 = por %p40, %p41
      %p43 = scmp.ne.s32.totalorder %s31, %s32
      %p44 = scmp.eq.s32.totalorder %s27, 1
      %p45 = por %p43, %p44
      %p47 = scmp.ne.s32.totalorder %s32, %s46
      %p48 = scmp.eq.s32.totalorder %s27, 0
      %p49 = por %p47, %p48
      %s50 = ssub.s32 %s21, %s28
      %p51 = scmp.eq.s32.totalorder %s50, 0
      %s53 = sadd.s32 %s52, 1
      %s54 = scalar_select %p51, %s52, %s53
      %p57 = pneg %p51
      %p58 = scmp.eq.s32.totalorder %s21, 1
      %p59 = por %p57, %p58
      %p60 = scmp.ne.s32.totalorder %s52, %s55
      %p61 = scmp.eq.s32.totalorder %s21, 0
      %p62 = por %p60, %p61
      %p63 = scmp.ne.s32.totalorder %s52, %s55
      %p64 = scmp.eq.s32.totalorder %s26, 1
      %p65 = por %p63, %p64
      %p66 = scmp.ne.s32.totalorder %s55, %s56
      %p67 = scmp.eq.s32.totalorder %s26, 0
      %p68 = por %p66, %p67
      %p69 = scmp.ne.s32.totalorder %s55, %s56
      %p70 = scmp.eq.s32.totalorder %s27, 1
      %p71 = por %p69, %p70
      %p73 = scmp.ne.s32.totalorder %s56, %s72
      %p74 = scmp.eq.s32.totalorder %s27, 0
      %p75 = por %p73, %p74
      %s76 = ssub.s32 %s21, %s28
      %p77 = scmp.eq.s32.totalorder %s76, 0
      %s79 = sadd.s32 %s78, 1
      %s80 = scalar_select %p77, %s78, %s79
      %p83 = pneg %p77
      %p84 = scmp.eq.s32.totalorder %s21, 1
      %p85 = por %p83, %p84
      %p86 = scmp.ne.s32.totalorder %s78, %s81
      %p87 = scmp.eq.s32.totalorder %s21, 0
      %p88 = por %p86, %p87
      %p89 = scmp.ne.s32.totalorder %s78, %s81
      %p90 = scmp.eq.s32.totalorder %s26, 1
      %p91 = por %p89, %p90
      %p92 = scmp.ne.s32.totalorder %s81, %s82
      %p93 = scmp.eq.s32.totalorder %s26, 0
      %p94 = por %p92, %p93
      %p95 = scmp.ne.s32.totalorder %s81, %s82
      %p96 = scmp.eq.s32.totalorder %s27, 1
      %p97 = por %p95, %p96
      %p99 = scmp.ne.s32.totalorder %s82, %s98
      %p100 = scmp.eq.s32.totalorder %s27, 0
      %p101 = por %p99, %p100
      %s102 = ssub.s32 %s21, %s28
      %p103 = scmp.eq.s32.totalorder %s102, 0
      %s105 = sadd.s32 %s104, 1
      %s106 = scalar_select %p103, %s104, %s105
      %p109 = pneg %p103
      %p110 = scmp.eq.s32.totalorder %s21, 1
      %p111 = por %p109, %p110
      %p112 = scmp.ne.s32.totalorder %s104, %s107
      %p113 = scmp.eq.s32.totalorder %s21, 0
      %p114 = por %p112, %p113
      %p115 = scmp.ne.s32.totalorder %s104, %s107
      %p116 = scmp.eq.s32.totalorder %s26, 1
      %p117 = por %p115, %p116
      %p118 = scmp.ne.s32.totalorder %s107, %s108
      %p119 = scmp.eq.s32.totalorder %s26, 0
      %p120 = por %p118, %p119
      %p121 = scmp.ne.s32.totalorder %s107, %s108
      %p122 = scmp.eq.s32.totalorder %s27, 1
      %p123 = por %p121, %p122
      %p125 = scmp.ne.s32.totalorder %s108, %s124
      %p126 = scmp.eq.s32.totalorder %s27, 0
      %p127 = por %p125, %p126
      %s128 = ssub.s32 %s21, %s28
      %p129 = scmp.eq.s32.totalorder %s128, 0
      %s131 = sadd.s32 %s130, 1
      %s132 = scalar_select %p129, %s130, %s131
      %p135 = pneg %p129
      %p136 = scmp.eq.s32.totalorder %s21, 1
      %p137 = por %p135, %p136
      %p138 = scmp.ne.s32.totalorder %s130, %s133
      %p139 = scmp.eq.s32.totalorder %s21, 0
      %p140 = por %p138, %p139
      %p141 = scmp.ne.s32.totalorder %s130, %s133
      %p142 = scmp.eq.s32.totalorder %s26, 1
      %p143 = por %p141, %p142
      %p144 = scmp.ne.s32.totalorder %s133, %s134
      %p145 = scmp.eq.s32.totalorder %s26, 0
      %p146 = por %p144, %p145
      %p147 = scmp.ne.s32.totalorder %s133, %s134
      %p148 = scmp.eq.s32.totalorder %s27, 1
      %p149 = por %p147, %p148
      %p151 = scmp.ne.s32.totalorder %s134, %s150
      %p152 = scmp.eq.s32.totalorder %s27, 0
      %p153 = por %p151, %p152
      %p154 = scmp.le.s32.totalorder 1, %s21
      %p155 = scmp.lt.s32.totalorder %s21, 3
      %p156 = pnand %p154, %p155
      %p157 = pneg %p156
      // Predicated region
      $region9: #{tpu_custom_call.1} parent=5 // pred_check
        _
      $region10: #{tpu_custom_call.1} parent=5 // pred_check_branch
        %159 = sbr.rel (%p156) target = $region12
      $region11: #{tpu_custom_call.1} parent=5 // pred_region
        %s160 = ssub.s32 %s21, 1
        // Predicated region
        $region13: #{tpu_custom_call.1} parent=11 // pred_check
          %p161 = pneg %p42
        $region14: #{tpu_custom_call.1} parent=11 // pred_check_branch
          %163 = sbr.rel (%p161) target = $region16
        $region15: #{tpu_custom_call.1} parent=11 // pred_region
          %165 = vsyncadd [#allocation3], 0
          %s167 = sshll.u32 %s0, 4
          %s168 = int_to_ptr.hbm [resolvable:$true] %s167
          %s169 = sshll.u32 [#allocation2], 4
          %s170 = int_to_ptr.vmem [resolvable:$true] %s169
          %172 = dma.hbm_to_vmem [thread:$0]  %s168, 384, %s170, [#allocation3]
        $region16: #{tpu_custom_call.1} parent=11 // pred_fallthru
          _
      $region12: #{tpu_custom_call.1} parent=5 // pred_fallthru
        _
      %p173 = scmp.lt.s32.totalorder %s21, 2
      // Predicated region
      $region17: #{tpu_custom_call.1} parent=5 // pred_check
        %p174 = pneg %p173
      $region18: #{tpu_custom_call.1} parent=5 // pred_check_branch
        %176 = sbr.rel (%p174) target = $region20
      $region19: #{tpu_custom_call.1} parent=5 // pred_region
        // Predicated region
        $region21: #{tpu_custom_call.1} parent=19 // pred_check
          %p177 = pneg %p62
        $region22: #{tpu_custom_call.1} parent=19 // pred_check_branch
          %179 = sbr.rel (%p177) target = $region24
        $region23: #{tpu_custom_call.1} parent=19 // pred_region
          %s180 = sand.u32 %s21, 1
          %s181 = scalar_lea.sflag [#allocation6], %s180
          %s182 = sand.u32 %s52, 1
          %s183 = smul.addr %s182, 1536
          %s184 = scalar_lea.vmem [#allocation5], %s183
          %s185 = smul.u32 4, %s21
          %187 = vsyncadd %s181, 0
          %s188 = smul.addr %s185, 4
          %s189 = scalar_lea.hbm %s1, %s188
          %s190 = sshll.u32 %s189, 4
          %s191 = int_to_ptr.hbm [resolvable:$true] %s190
          %s192 = sshll.u32 %s184, 4
          %s193 = int_to_ptr.vmem [resolvable:$true] %s192
          %198 = dma.hbm_to_vmem [thread:$0]  %s191, 24576, %s193, %s181, 512, 256, 16
        $region24: #{tpu_custom_call.1} parent=19 // pred_fallthru
          _
        // Predicated region
        $region25: #{tpu_custom_call.1} parent=19 // pred_check
          %p199 = pneg %p88
        $region26: #{tpu_custom_call.1} parent=19 // pred_check_branch
          %201 = sbr.rel (%p199) target = $region28
        $region27: #{tpu_custom_call.1} parent=19 // pred_region
          %s202 = sand.u32 %s21, 1
          %s203 = scalar_lea.sflag [#allocation6], %s202
          %s204 = sand.u32 %s78, 1
          %s205 = smul.addr %s204, 4
          %s206 = scalar_lea.vmem [#allocation7], %s205
          %s207 = smul.u32 4, %s21
          %209 = vsyncadd %s203, 0
          %s210 = scalar_lea.hbm %s2, %s207
          %s212 = sshll.u32 %s210, 4
          %s213 = int_to_ptr.hbm [resolvable:$true] %s212
          %s214 = sshll.u32 %s206, 4
          %s215 = int_to_ptr.vmem [resolvable:$true] %s214
          %217 = dma.hbm_to_vmem [thread:$0]  %s213, 64, %s215, %s203
        $region28: #{tpu_custom_call.1} parent=19 // pred_fallthru
          _
      $region20: #{tpu_custom_call.1} parent=5 // pred_fallthru
        _
      %p218 = scmp.le.s32.totalorder 1, %s21
      %p219 = scmp.lt.s32.totalorder %s21, 3
      %p220 = pnand %p218, %p219
      %p221 = pneg %p220
      // Predicated region
      $region29: #{tpu_custom_call.1} parent=5 // pred_check
        _
      $region30: #{tpu_custom_call.1} parent=5 // pred_check_branch
        %223 = sbr.rel (%p220) target = $region32
      $region31: #{tpu_custom_call.1} parent=5 // pred_region
        %s224 = ssub.s32 %s21, 1
        // Predicated region
        $region33: #{tpu_custom_call.1} parent=31 // pred_check
          %p225 = pneg %p42
        $region34: #{tpu_custom_call.1} parent=31 // pred_check_branch
          %227 = sbr.rel (%p225) target = $region36
        $region35: #{tpu_custom_call.1} parent=31 // pred_region
          %229 = dma.done [#allocation3], 384
        $region36: #{tpu_custom_call.1} parent=31 // pred_fallthru
          _
        %s230 = sand.u32 %s26, 1
        %s231 = scalar_lea.sflag [#allocation6], %s230
        %s232 = sand.u32 %s55, 1
        %s233 = smul.addr %s232, 1536
        %s234 = scalar_lea.vmem [#allocation5], %s233
        // Predicated region
        $region37: #{tpu_custom_call.1} parent=31 // pred_check
          %p235 = pneg %p68
        $region38: #{tpu_custom_call.1} parent=31 // pred_check_branch
          %237 = sbr.rel (%p235) target = $region40
        $region39: #{tpu_custom_call.1} parent=31 // pred_region
          %239 = dma.done %s231, 24576
        $region40: #{tpu_custom_call.1} parent=31 // pred_fallthru
          _
        %s240 = sand.u32 %s26, 1
        %s241 = scalar_lea.sflag [#allocation6], %s240
        %s242 = sand.u32 %s81, 1
        %s243 = smul.addr %s242, 4
        %s244 = scalar_lea.vmem [#allocation7], %s243
        // Predicated region
        $region41: #{tpu_custom_call.1} parent=31 // pred_check
          %p245 = pneg %p94
        $region42: #{tpu_custom_call.1} parent=31 // pred_check_branch
          %247 = sbr.rel (%p245) target = $region44
        $region43: #{tpu_custom_call.1} parent=31 // pred_region
          %249 = dma.done %s241, 64
        $region44: #{tpu_custom_call.1} parent=31 // pred_fallthru
          _
        %p250 = pneg %p42
        %p251 = pneg %p39
        %s252 = sand.u32 %s26, 1
        %s253 = scalar_lea.sflag [#allocation6], %s252
        %s254 = sand.u32 %s55, 1
        %s255 = smul.addr %s254, 1536
        %s256 = scalar_lea.vmem [#allocation5], %s255
        %p257 = pneg %p68
        %p258 = pneg %p65
        %s259 = sand.u32 %s26, 1
        %s260 = scalar_lea.sflag [#allocation6], %s259
        %s261 = sand.u32 %s81, 1
        %s262 = smul.addr %s261, 4
        %s263 = scalar_lea.vmem [#allocation7], %s262
        %p264 = pneg %p94
        %p265 = pneg %p91
        %p266 = pneg %p120
        %p267 = pneg %p117
        %s268 = sand.u32 %s107, 1
        %s269 = scalar_lea.sflag [#allocation4], %s268
        %s270 = sand.u32 %s107, 1
        %s271 = smul.addr %s270, 16
        %s272 = scalar_lea.vmem [#allocation8], %s271
        %p273 = pneg %p146
        %p274 = pneg %p143
        %s275 = sand.u32 %s133, 1
        %s276 = scalar_lea.sflag [#allocation10], %s275
        %s277 = sand.u32 %s133, 1
        %s278 = smul.addr %s277, 8
        %s279 = scalar_lea.vmem [#allocation9], %s278
        %s280 = smul.u32 4, %s26
        %s281 = smul.u32 4, %s26
        %s282 = smul.u32 4, %s26
        %s283 = smul.u32 4, %s26
        %v284 = vld [vmem:[#allocation2] sm:$0xff]
        %v285 = vld [vmem:[#allocation2 + $0x8] sm:$0xff]
        %v286 = vld [vmem:[#allocation2 + $0x10] sm:$0xff]
        %v287 = vld [vmem:[%s234] sm:$0xff]
        %v288 = vld [vmem:[%s234 + $0x8] sm:$0xff]
        %v289 = vld [vmem:[%s234 + $0x10] sm:$0xff]
        %v290 = vld [vmem:[%s234 + $0x18] sm:$0xff]
        %v291 = vld [vmem:[%s234 + $0x20] sm:$0xff]
        %v292 = vld [vmem:[%s234 + $0x28] sm:$0xff]
        %v293 = vld [vmem:[%s234 + $0x30] sm:$0xff]
        %v294 = vld [vmem:[%s234 + $0x38] sm:$0xff]
        %v295 = vld [vmem:[%s234 + $0x40] sm:$0xff]
        %v296 = vld [vmem:[%s234 + $0x48] sm:$0xff]
        %v297 = vld [vmem:[%s234 + $0x50] sm:$0xff]
        %v298 = vld [vmem:[%s234 + $0x58] sm:$0xff]
        %v299 = vld [vmem:[%s234 + $0x60] sm:$0xff]
        %v300 = vld [vmem:[%s234 + $0x68] sm:$0xff]
        %v301 = vld [vmem:[%s234 + $0x70] sm:$0xff]
        %v302 = vld [vmem:[%s234 + $0x78] sm:$0xff]
        %v303 = vld [vmem:[%s234 + $0x80] sm:$0xff]
        %v304 = vld [vmem:[%s234 + $0x88] sm:$0xff]
        %v305 = vld [vmem:[%s234 + $0x90] sm:$0xff]
        %v306 = vld [vmem:[%s234 + $0x98] sm:$0xff]
        %v307 = vld [vmem:[%s234 + $0xa0] sm:$0xff]
        %v308 = vld [vmem:[%s234 + $0xa8] sm:$0xff]
        %v309 = vld [vmem:[%s234 + $0xb0] sm:$0xff]
        %v310 = vld [vmem:[%s234 + $0xb8] sm:$0xff]
        %v311 = vld [vmem:[%s234 + $0xc0] sm:$0xff]
        %v312 = vld [vmem:[%s234 + $0xc8] sm:$0xff]
        %v313 = vld [vmem:[%s234 + $0xd0] sm:$0xff]
        %v314 = vld [vmem:[%s234 + $0xd8] sm:$0xff]
        %v315 = vld [vmem:[%s234 + $0xe0] sm:$0xff]
        %v316 = vld [vmem:[%s234 + $0xe8] sm:$0xff]
        %v317 = vld [vmem:[%s234 + $0xf0] sm:$0xff]
        %v318 = vld [vmem:[%s234 + $0xf8] sm:$0xff]
        %v319 = vld [vmem:[%s234 + $0x100] sm:$0xff]
        %v320 = vld [vmem:[%s234 + $0x108] sm:$0xff]
        %v321 = vld [vmem:[%s234 + $0x110] sm:$0xff]
        %v322 = vld [vmem:[%s234 + $0x118] sm:$0xff]
        %v323 = vld [vmem:[%s234 + $0x120] sm:$0xff]
        %v324 = vld [vmem:[%s234 + $0x128] sm:$0xff]
        %v325 = vld [vmem:[%s234 + $0x130] sm:$0xff]
        %v326 = vld [vmem:[%s234 + $0x138] sm:$0xff]
        %v327 = vld [vmem:[%s234 + $0x140] sm:$0xff]
        %v328 = vld [vmem:[%s234 + $0x148] sm:$0xff]
        %v329 = vld [vmem:[%s234 + $0x150] sm:$0xff]
        %v330 = vld [vmem:[%s234 + $0x158] sm:$0xff]
        %v331 = vld [vmem:[%s234 + $0x160] sm:$0xff]
        %v332 = vld [vmem:[%s234 + $0x168] sm:$0xff]
        %v333 = vld [vmem:[%s234 + $0x170] sm:$0xff]
        %v334 = vld [vmem:[%s234 + $0x178] sm:$0xff]
        %v335 = vld [vmem:[%s234 + $0x180] sm:$0xff]
        %v336 = vld [vmem:[%s234 + $0x188] sm:$0xff]
        %v337 = vld [vmem:[%s234 + $0x190] sm:$0xff]
        %v338 = vld [vmem:[%s234 + $0x198] sm:$0xff]
        %v339 = vld [vmem:[%s234 + $0x1a0] sm:$0xff]
        %v340 = vld [vmem:[%s234 + $0x1a8] sm:$0xff]
        %v341 = vld [vmem:[%s234 + $0x1b0] sm:$0xff]
        %v342 = vld [vmem:[%s234 + $0x1b8] sm:$0xff]
        %v343 = vld [vmem:[%s234 + $0x1c0] sm:$0xff]
        %v344 = vld [vmem:[%s234 + $0x1c8] sm:$0xff]
        %v345 = vld [vmem:[%s234 + $0x1d0] sm:$0xff]
        %v346 = vld [vmem:[%s234 + $0x1d8] sm:$0xff]
        %v347 = vld [vmem:[%s234 + $0x1e0] sm:$0xff]
        %v348 = vld [vmem:[%s234 + $0x1e8] sm:$0xff]
        %v349 = vld [vmem:[%s234 + $0x1f0] sm:$0xff]
        %v350 = vld [vmem:[%s234 + $0x1f8] sm:$0xff]
        %v351 = vld [vmem:[%s234 + $0x200] sm:$0xff]
        %v352 = vld [vmem:[%s234 + $0x208] sm:$0xff]
        %v353 = vld [vmem:[%s234 + $0x210] sm:$0xff]
        %v354 = vld [vmem:[%s234 + $0x218] sm:$0xff]
        %v355 = vld [vmem:[%s234 + $0x220] sm:$0xff]
        %v356 = vld [vmem:[%s234 + $0x228] sm:$0xff]
        %v357 = vld [vmem:[%s234 + $0x230] sm:$0xff]
        %v358 = vld [vmem:[%s234 + $0x238] sm:$0xff]
        %v359 = vld [vmem:[%s234 + $0x240] sm:$0xff]
        %v360 = vld [vmem:[%s234 + $0x248] sm:$0xff]
        %v361 = vld [vmem:[%s234 + $0x250] sm:$0xff]
        %v362 = vld [vmem:[%s234 + $0x258] sm:$0xff]
        %v363 = vld [vmem:[%s234 + $0x260] sm:$0xff]
        %v364 = vld [vmem:[%s234 + $0x268] sm:$0xff]
        %v365 = vld [vmem:[%s234 + $0x270] sm:$0xff]
        %v366 = vld [vmem:[%s234 + $0x278] sm:$0xff]
        %v367 = vld [vmem:[%s234 + $0x280] sm:$0xff]
        %v368 = vld [vmem:[%s234 + $0x288] sm:$0xff]
        %v369 = vld [vmem:[%s234 + $0x290] sm:$0xff]
        %v370 = vld [vmem:[%s234 + $0x298] sm:$0xff]
        %v371 = vld [vmem:[%s234 + $0x2a0] sm:$0xff]
        %v372 = vld [vmem:[%s234 + $0x2a8] sm:$0xff]
        %v373 = vld [vmem:[%s234 + $0x2b0] sm:$0xff]
        %v374 = vld [vmem:[%s234 + $0x2b8] sm:$0xff]
        %v375 = vld [vmem:[%s234 + $0x2c0] sm:$0xff]
        %v376 = vld [vmem:[%s234 + $0x2c8] sm:$0xff]
        %v377 = vld [vmem:[%s234 + $0x2d0] sm:$0xff]
        %v378 = vld [vmem:[%s234 + $0x2d8] sm:$0xff]
        %v379 = vld [vmem:[%s234 + $0x2e0] sm:$0xff]
        %v380 = vld [vmem:[%s234 + $0x2e8] sm:$0xff]
        %v381 = vld [vmem:[%s234 + $0x2f0] sm:$0xff]
        %v382 = vld [vmem:[%s234 + $0x2f8] sm:$0xff]
        %v383 = vld [vmem:[%s234 + $0x300] sm:$0xff]
        %v384 = vld [vmem:[%s234 + $0x308] sm:$0xff]
        %v385 = vld [vmem:[%s234 + $0x310] sm:$0xff]
        %v386 = vld [vmem:[%s234 + $0x318] sm:$0xff]
        %v387 = vld [vmem:[%s234 + $0x320] sm:$0xff]
        %v388 = vld [vmem:[%s234 + $0x328] sm:$0xff]
        %v389 = vld [vmem:[%s234 + $0x330] sm:$0xff]
        %v390 = vld [vmem:[%s234 + $0x338] sm:$0xff]
        %v391 = vld [vmem:[%s234 + $0x340] sm:$0xff]
        %v392 = vld [vmem:[%s234 + $0x348] sm:$0xff]
        %v393 = vld [vmem:[%s234 + $0x350] sm:$0xff]
        %v394 = vld [vmem:[%s234 + $0x358] sm:$0xff]
        %v395 = vld [vmem:[%s234 + $0x360] sm:$0xff]
        %v396 = vld [vmem:[%s234 + $0x368] sm:$0xff]
        %v397 = vld [vmem:[%s234 + $0x370] sm:$0xff]
        %v398 = vld [vmem:[%s234 + $0x378] sm:$0xff]
        %v399 = vld [vmem:[%s234 + $0x380] sm:$0xff]
        %v400 = vld [vmem:[%s234 + $0x388] sm:$0xff]
        %v401 = vld [vmem:[%s234 + $0x390] sm:$0xff]
        %v402 = vld [vmem:[%s234 + $0x398] sm:$0xff]
        %v403 = vld [vmem:[%s234 + $0x3a0] sm:$0xff]
        %v404 = vld [vmem:[%s234 + $0x3a8] sm:$0xff]
        %v405 = vld [vmem:[%s234 + $0x3b0] sm:$0xff]
        %v406 = vld [vmem:[%s234 + $0x3b8] sm:$0xff]
        %v407 = vld [vmem:[%s234 + $0x3c0] sm:$0xff]
        %v408 = vld [vmem:[%s234 + $0x3c8] sm:$0xff]
        %v409 = vld [vmem:[%s234 + $0x3d0] sm:$0xff]
        %v410 = vld [vmem:[%s234 + $0x3d8] sm:$0xff]
        %v411 = vld [vmem:[%s234 + $0x3e0] sm:$0xff]
        %v412 = vld [vmem:[%s234 + $0x3e8] sm:$0xff]
        %v413 = vld [vmem:[%s234 + $0x3f0] sm:$0xff]
        %v414 = vld [vmem:[%s234 + $0x3f8] sm:$0xff]
        %v415 = vld [vmem:[%s234 + $0x400] sm:$0xff]
        %v416 = vld [vmem:[%s234 + $0x408] sm:$0xff]
        %v417 = vld [vmem:[%s234 + $0x410] sm:$0xff]
        %v418 = vld [vmem:[%s234 + $0x418] sm:$0xff]
        %v419 = vld [vmem:[%s234 + $0x420] sm:$0xff]
        %v420 = vld [vmem:[%s234 + $0x428] sm:$0xff]
        %v421 = vld [vmem:[%s234 + $0x430] sm:$0xff]
        %v422 = vld [vmem:[%s234 + $0x438] sm:$0xff]
        %v423 = vld [vmem:[%s234 + $0x440] sm:$0xff]
        %v424 = vld [vmem:[%s234 + $0x448] sm:$0xff]
        %v425 = vld [vmem:[%s234 + $0x450] sm:$0xff]
        %v426 = vld [vmem:[%s234 + $0x458] sm:$0xff]
        %v427 = vld [vmem:[%s234 + $0x460] sm:$0xff]
        %v428 = vld [vmem:[%s234 + $0x468] sm:$0xff]
        %v429 = vld [vmem:[%s234 + $0x470] sm:$0xff]
        %v430 = vld [vmem:[%s234 + $0x478] sm:$0xff]
        %v431 = vld [vmem:[%s234 + $0x480] sm:$0xff]
        %v432 = vld [vmem:[%s234 + $0x488] sm:$0xff]
        %v433 = vld [vmem:[%s234 + $0x490] sm:$0xff]
        %v434 = vld [vmem:[%s234 + $0x498] sm:$0xff]
        %v435 = vld [vmem:[%s234 + $0x4a0] sm:$0xff]
        %v436 = vld [vmem:[%s234 + $0x4a8] sm:$0xff]
        %v437 = vld [vmem:[%s234 + $0x4b0] sm:$0xff]
        %v438 = vld [vmem:[%s234 + $0x4b8] sm:$0xff]
        %v439 = vld [vmem:[%s234 + $0x4c0] sm:$0xff]
        %v440 = vld [vmem:[%s234 + $0x4c8] sm:$0xff]
        %v441 = vld [vmem:[%s234 + $0x4d0] sm:$0xff]
        %v442 = vld [vmem:[%s234 + $0x4d8] sm:$0xff]
        %v443 = vld [vmem:[%s234 + $0x4e0] sm:$0xff]
        %v444 = vld [vmem:[%s234 + $0x4e8] sm:$0xff]
        %v445 = vld [vmem:[%s234 + $0x4f0] sm:$0xff]
        %v446 = vld [vmem:[%s234 + $0x4f8] sm:$0xff]
        %v447 = vld [vmem:[%s234 + $0x500] sm:$0xff]
        %v448 = vld [vmem:[%s234 + $0x508] sm:$0xff]
        %v449 = vld [vmem:[%s234 + $0x510] sm:$0xff]
        %v450 = vld [vmem:[%s234 + $0x518] sm:$0xff]
        %v451 = vld [vmem:[%s234 + $0x520] sm:$0xff]
        %v452 = vld [vmem:[%s234 + $0x528] sm:$0xff]
        %v453 = vld [vmem:[%s234 + $0x530] sm:$0xff]
        %v454 = vld [vmem:[%s234 + $0x538] sm:$0xff]
        %v455 = vld [vmem:[%s234 + $0x540] sm:$0xff]
        %v456 = vld [vmem:[%s234 + $0x548] sm:$0xff]
        %v457 = vld [vmem:[%s234 + $0x550] sm:$0xff]
        %v458 = vld [vmem:[%s234 + $0x558] sm:$0xff]
        %v459 = vld [vmem:[%s234 + $0x560] sm:$0xff]
        %v460 = vld [vmem:[%s234 + $0x568] sm:$0xff]
        %v461 = vld [vmem:[%s234 + $0x570] sm:$0xff]
        %v462 = vld [vmem:[%s234 + $0x578] sm:$0xff]
        %v463 = vld [vmem:[%s234 + $0x580] sm:$0xff]
        %v464 = vld [vmem:[%s234 + $0x588] sm:$0xff]
        %v465 = vld [vmem:[%s234 + $0x590] sm:$0xff]
        %v466 = vld [vmem:[%s234 + $0x598] sm:$0xff]
        %v467 = vld [vmem:[%s234 + $0x5a0] sm:$0xff]
        %v468 = vld [vmem:[%s234 + $0x5a8] sm:$0xff]
        %v469 = vld [vmem:[%s234 + $0x5b0] sm:$0xff]
        %v470 = vld [vmem:[%s234 + $0x5b8] sm:$0xff]
        %v471 = vld [vmem:[%s234 + $0x5c0] sm:$0xff]
        %v472 = vld [vmem:[%s234 + $0x5c8] sm:$0xff]
        %v473 = vld [vmem:[%s234 + $0x5d0] sm:$0xff]
        %v474 = vld [vmem:[%s234 + $0x5d8] sm:$0xff]
        %v475 = vld [vmem:[%s234 + $0x5e0] sm:$0xff]
        %v476 = vld [vmem:[%s234 + $0x5e8] sm:$0xff]
        %v477 = vld [vmem:[%s234 + $0x5f0] sm:$0xff]
        %v478 = vld [vmem:[%s234 + $0x5f8] sm:$0xff]
        %v479 = vld [vmem:[%s244] sm:$0xf]
        %v481 = vperm.slane %v479, 0
        %v482 = vperm.slane %v479, 1
        %v483 = vperm.slane %v479, 2
        %v484 = vperm.slane %v479, 3
        %v492 = vunpack.c.l.b16 %v284
        %v493 = vunpack.c.h.b16 %v284
        %v494 = vunpack.c.l.b16 %v285
        %v495 = vunpack.c.h.b16 %v285
        %v496 = vunpack.c.l.b16 %v286
        %v497 = vunpack.c.h.b16 %v286
        %v498 = vpack.c.b16 %v492, %v492
        %v499 = vpack.c.b16 %v493, %v493
        %v500 = vpack.c.b16 %v494, %v494
        %v501 = vpack.c.b16 %v495, %v495
        %v502 = vpack.c.b16 %v496, %v496
        %v503 = vpack.c.b16 %v497, %v497
        %v702 = vunpack.c.l.b16 %v287
        %v703 = vunpack.c.h.b16 %v287
        %v704 = vunpack.c.l.b16 %v288
        %v705 = vunpack.c.h.b16 %v288
        %v706 = vunpack.c.l.b16 %v289
        %v707 = vunpack.c.h.b16 %v289
        %v708 = vunpack.c.l.b16 %v290
        %v709 = vunpack.c.h.b16 %v290
        %v710 = vunpack.c.l.b16 %v291
        %v711 = vunpack.c.h.b16 %v291
        %v712 = vunpack.c.l.b16 %v292
        %v713 = vunpack.c.h.b16 %v292
        %v714 = vunpack.c.l.b16 %v293
        %v715 = vunpack.c.h.b16 %v293
        %v716 = vunpack.c.l.b16 %v294
        %v717 = vunpack.c.h.b16 %v294
        %v718 = vunpack.c.l.b16 %v295
        %v719 = vunpack.c.h.b16 %v295
        %v720 = vunpack.c.l.b16 %v296
        %v721 = vunpack.c.h.b16 %v296
        %v722 = vunpack.c.l.b16 %v297
        %v723 = vunpack.c.h.b16 %v297
        %v724 = vunpack.c.l.b16 %v298
        %v725 = vunpack.c.h.b16 %v298
        %v726 = vunpack.c.l.b16 %v299
        %v727 = vunpack.c.h.b16 %v299
        %v728 = vunpack.c.l.b16 %v300
        %v729 = vunpack.c.h.b16 %v300
        %v730 = vunpack.c.l.b16 %v301
        %v731 = vunpack.c.h.b16 %v301
        %v732 = vunpack.c.l.b16 %v302
        %v733 = vunpack.c.h.b16 %v302
        %v734 = vunpack.c.l.b16 %v303
        %v735 = vunpack.c.h.b16 %v303
        %v736 = vunpack.c.l.b16 %v304
        %v737 = vunpack.c.h.b16 %v304
        %v738 = vunpack.c.l.b16 %v305
        %v739 = vunpack.c.h.b16 %v305
        %v740 = vunpack.c.l.b16 %v306
        %v741 = vunpack.c.h.b16 %v306
        %v742 = vunpack.c.l.b16 %v307
        %v743 = vunpack.c.h.b16 %v307
        %v744 = vunpack.c.l.b16 %v308
        %v745 = vunpack.c.h.b16 %v308
        %v746 = vunpack.c.l.b16 %v309
        %v747 = vunpack.c.h.b16 %v309
        %v748 = vunpack.c.l.b16 %v310
        %v749 = vunpack.c.h.b16 %v310
        %v750 = vunpack.c.l.b16 %v311
        %v751 = vunpack.c.h.b16 %v311
        %v752 = vunpack.c.l.b16 %v312
        %v753 = vunpack.c.h.b16 %v312
        %v754 = vunpack.c.l.b16 %v313
        %v755 = vunpack.c.h.b16 %v313
        %v756 = vunpack.c.l.b16 %v314
        %v757 = vunpack.c.h.b16 %v314
        %v758 = vunpack.c.l.b16 %v315
        %v759 = vunpack.c.h.b16 %v315
        %v760 = vunpack.c.l.b16 %v316
        %v761 = vunpack.c.h.b16 %v316
        %v762 = vunpack.c.l.b16 %v317
        %v763 = vunpack.c.h.b16 %v317
        %v764 = vunpack.c.l.b16 %v318
        %v765 = vunpack.c.h.b16 %v318
        %v766 = vunpack.c.l.b16 %v319
        %v767 = vunpack.c.h.b16 %v319
        %v768 = vunpack.c.l.b16 %v320
        %v769 = vunpack.c.h.b16 %v320
        %v770 = vunpack.c.l.b16 %v321
        %v771 = vunpack.c.h.b16 %v321
        %v772 = vunpack.c.l.b16 %v322
        %v773 = vunpack.c.h.b16 %v322
        %v774 = vunpack.c.l.b16 %v323
        %v775 = vunpack.c.h.b16 %v323
        %v776 = vunpack.c.l.b16 %v324
        %v777 = vunpack.c.h.b16 %v324
        %v778 = vunpack.c.l.b16 %v325
        %v779 = vunpack.c.h.b16 %v325
        %v780 = vunpack.c.l.b16 %v326
        %v781 = vunpack.c.h.b16 %v326
        %v782 = vunpack.c.l.b16 %v327
        %v783 = vunpack.c.h.b16 %v327
        %v784 = vunpack.c.l.b16 %v328
        %v785 = vunpack.c.h.b16 %v328
        %v786 = vunpack.c.l.b16 %v329
        %v787 = vunpack.c.h.b16 %v329
        %v788 = vunpack.c.l.b16 %v330
        %v789 = vunpack.c.h.b16 %v330
        %v790 = vunpack.c.l.b16 %v331
        %v791 = vunpack.c.h.b16 %v331
        %v792 = vunpack.c.l.b16 %v332
        %v793 = vunpack.c.h.b16 %v332
        %v794 = vunpack.c.l.b16 %v333
        %v795 = vunpack.c.h.b16 %v333
        %v796 = vunpack.c.l.b16 %v334
        %v797 = vunpack.c.h.b16 %v334
        %v798 = vunpack.c.l.b16 %v335
        %v799 = vunpack.c.h.b16 %v335
        %v800 = vunpack.c.l.b16 %v336
        %v801 = vunpack.c.h.b16 %v336
        %v802 = vunpack.c.l.b16 %v337
        %v803 = vunpack.c.h.b16 %v337
        %v804 = vunpack.c.l.b16 %v338
        %v805 = vunpack.c.h.b16 %v338
        %v806 = vunpack.c.l.b16 %v339
        %v807 = vunpack.c.h.b16 %v339
        %v808 = vunpack.c.l.b16 %v340
        %v809 = vunpack.c.h.b16 %v340
        %v810 = vunpack.c.l.b16 %v341
        %v811 = vunpack.c.h.b16 %v341
        %v812 = vunpack.c.l.b16 %v342
        %v813 = vunpack.c.h.b16 %v342
        %v814 = vunpack.c.l.b16 %v343
        %v815 = vunpack.c.h.b16 %v343
        %v816 = vunpack.c.l.b16 %v344
        %v817 = vunpack.c.h.b16 %v344
        %v818 = vunpack.c.l.b16 %v345
        %v819 = vunpack.c.h.b16 %v345
        %v820 = vunpack.c.l.b16 %v346
        %v821 = vunpack.c.h.b16 %v346
        %v822 = vunpack.c.l.b16 %v347
        %v823 = vunpack.c.h.b16 %v347
        %v824 = vunpack.c.l.b16 %v348
        %v825 = vunpack.c.h.b16 %v348
        %v826 = vunpack.c.l.b16 %v349
        %v827 = vunpack.c.h.b16 %v349
        %v828 = vunpack.c.l.b16 %v350
        %v829 = vunpack.c.h.b16 %v350
        %v830 = vunpack.c.l.b16 %v351
        %v831 = vunpack.c.h.b16 %v351
        %v832 = vunpack.c.l.b16 %v352
        %v833 = vunpack.c.h.b16 %v352
        %v834 = vunpack.c.l.b16 %v353
        %v835 = vunpack.c.h.b16 %v353
        %v836 = vunpack.c.l.b16 %v354
        %v837 = vunpack.c.h.b16 %v354
        %v838 = vunpack.c.l.b16 %v355
        %v839 = vunpack.c.h.b16 %v355
        %v840 = vunpack.c.l.b16 %v356
        %v841 = vunpack.c.h.b16 %v356
        %v842 = vunpack.c.l.b16 %v357
        %v843 = vunpack.c.h.b16 %v357
        %v844 = vunpack.c.l.b16 %v358
        %v845 = vunpack.c.h.b16 %v358
        %v846 = vunpack.c.l.b16 %v359
        %v847 = vunpack.c.h.b16 %v359
        %v848 = vunpack.c.l.b16 %v360
        %v849 = vunpack.c.h.b16 %v360
        %v850 = vunpack.c.l.b16 %v361
        %v851 = vunpack.c.h.b16 %v361
        %v852 = vunpack.c.l.b16 %v362
        %v853 = vunpack.c.h.b16 %v362
        %v854 = vunpack.c.l.b16 %v363
        %v855 = vunpack.c.h.b16 %v363
        %v856 = vunpack.c.l.b16 %v364
        %v857 = vunpack.c.h.b16 %v364
        %v858 = vunpack.c.l.b16 %v365
        %v859 = vunpack.c.h.b16 %v365
        %v860 = vunpack.c.l.b16 %v366
        %v861 = vunpack.c.h.b16 %v366
        %v862 = vunpack.c.l.b16 %v367
        %v863 = vunpack.c.h.b16 %v367
        %v864 = vunpack.c.l.b16 %v368
        %v865 = vunpack.c.h.b16 %v368
        %v866 = vunpack.c.l.b16 %v369
        %v867 = vunpack.c.h.b16 %v369
        %v868 = vunpack.c.l.b16 %v370
        %v869 = vunpack.c.h.b16 %v370
        %v870 = vunpack.c.l.b16 %v371
        %v871 = vunpack.c.h.b16 %v371
        %v872 = vunpack.c.l.b16 %v372
        %v873 = vunpack.c.h.b16 %v372
        %v874 = vunpack.c.l.b16 %v373
        %v875 = vunpack.c.h.b16 %v373
        %v876 = vunpack.c.l.b16 %v374
        %v877 = vunpack.c.h.b16 %v374
        %v878 = vunpack.c.l.b16 %v375
        %v879 = vunpack.c.h.b16 %v375
        %v880 = vunpack.c.l.b16 %v376
        %v881 = vunpack.c.h.b16 %v376
        %v882 = vunpack.c.l.b16 %v377
        %v883 = vunpack.c.h.b16 %v377
        %v884 = vunpack.c.l.b16 %v378
        %v885 = vunpack.c.h.b16 %v378
        %v886 = vunpack.c.l.b16 %v379
        %v887 = vunpack.c.h.b16 %v379
        %v888 = vunpack.c.l.b16 %v380
        %v889 = vunpack.c.h.b16 %v380
        %v890 = vunpack.c.l.b16 %v381
        %v891 = vunpack.c.h.b16 %v381
        %v892 = vunpack.c.l.b16 %v382
        %v893 = vunpack.c.h.b16 %v382
        %v894 = vunpack.c.l.b16 %v383
        %v895 = vunpack.c.h.b16 %v383
        %v896 = vunpack.c.l.b16 %v384
        %v897 = vunpack.c.h.b16 %v384
        %v898 = vunpack.c.l.b16 %v385
        %v899 = vunpack.c.h.b16 %v385
        %v900 = vunpack.c.l.b16 %v386
        %v901 = vunpack.c.h.b16 %v386
        %v902 = vunpack.c.l.b16 %v387
        %v903 = vunpack.c.h.b16 %v387
        %v904 = vunpack.c.l.b16 %v388
        %v905 = vunpack.c.h.b16 %v388
        %v906 = vunpack.c.l.b16 %v389
        %v907 = vunpack.c.h.b16 %v389
        %v908 = vunpack.c.l.b16 %v390
        %v909 = vunpack.c.h.b16 %v390
        %v910 = vunpack.c.l.b16 %v391
        %v911 = vunpack.c.h.b16 %v391
        %v912 = vunpack.c.l.b16 %v392
        %v913 = vunpack.c.h.b16 %v392
        %v914 = vunpack.c.l.b16 %v393
        %v915 = vunpack.c.h.b16 %v393
        %v916 = vunpack.c.l.b16 %v394
        %v917 = vunpack.c.h.b16 %v394
        %v918 = vunpack.c.l.b16 %v395
        %v919 = vunpack.c.h.b16 %v395
        %v920 = vunpack.c.l.b16 %v396
        %v921 = vunpack.c.h.b16 %v396
        %v922 = vunpack.c.l.b16 %v397
        %v923 = vunpack.c.h.b16 %v397
        %v924 = vunpack.c.l.b16 %v398
        %v925 = vunpack.c.h.b16 %v398
        %v926 = vunpack.c.l.b16 %v399
        %v927 = vunpack.c.h.b16 %v399
        %v928 = vunpack.c.l.b16 %v400
        %v929 = vunpack.c.h.b16 %v400
        %v930 = vunpack.c.l.b16 %v401
        %v931 = vunpack.c.h.b16 %v401
        %v932 = vunpack.c.l.b16 %v402
        %v933 = vunpack.c.h.b16 %v402
        %v934 = vunpack.c.l.b16 %v403
        %v935 = vunpack.c.h.b16 %v403
        %v936 = vunpack.c.l.b16 %v404
        %v937 = vunpack.c.h.b16 %v404
        %v938 = vunpack.c.l.b16 %v405
        %v939 = vunpack.c.h.b16 %v405
        %v940 = vunpack.c.l.b16 %v406
        %v941 = vunpack.c.h.b16 %v406
        %v942 = vunpack.c.l.b16 %v407
        %v943 = vunpack.c.h.b16 %v407
        %v944 = vunpack.c.l.b16 %v408
        %v945 = vunpack.c.h.b16 %v408
        %v946 = vunpack.c.l.b16 %v409
        %v947 = vunpack.c.h.b16 %v409
        %v948 = vunpack.c.l.b16 %v410
        %v949 = vunpack.c.h.b16 %v410
        %v950 = vunpack.c.l.b16 %v411
        %v951 = vunpack.c.h.b16 %v411
        %v952 = vunpack.c.l.b16 %v412
        %v953 = vunpack.c.h.b16 %v412
        %v954 = vunpack.c.l.b16 %v413
        %v955 = vunpack.c.h.b16 %v413
        %v956 = vunpack.c.l.b16 %v414
        %v957 = vunpack.c.h.b16 %v414
        %v958 = vunpack.c.l.b16 %v415
        %v959 = vunpack.c.h.b16 %v415
        %v960 = vunpack.c.l.b16 %v416
        %v961 = vunpack.c.h.b16 %v416
        %v962 = vunpack.c.l.b16 %v417
        %v963 = vunpack.c.h.b16 %v417
        %v964 = vunpack.c.l.b16 %v418
        %v965 = vunpack.c.h.b16 %v418
        %v966 = vunpack.c.l.b16 %v419
        %v967 = vunpack.c.h.b16 %v419
        %v968 = vunpack.c.l.b16 %v420
        %v969 = vunpack.c.h.b16 %v420
        %v970 = vunpack.c.l.b16 %v421
        %v971 = vunpack.c.h.b16 %v421
        %v972 = vunpack.c.l.b16 %v422
        %v973 = vunpack.c.h.b16 %v422
        %v974 = vunpack.c.l.b16 %v423
        %v975 = vunpack.c.h.b16 %v423
        %v976 = vunpack.c.l.b16 %v424
        %v977 = vunpack.c.h.b16 %v424
        %v978 = vunpack.c.l.b16 %v425
        %v979 = vunpack.c.h.b16 %v425
        %v980 = vunpack.c.l.b16 %v426
        %v981 = vunpack.c.h.b16 %v426
        %v982 = vunpack.c.l.b16 %v427
        %v983 = vunpack.c.h.b16 %v427
        %v984 = vunpack.c.l.b16 %v428
        %v985 = vunpack.c.h.b16 %v428
        %v986 = vunpack.c.l.b16 %v429
        %v987 = vunpack.c.h.b16 %v429
        %v988 = vunpack.c.l.b16 %v430
        %v989 = vunpack.c.h.b16 %v430
        %v990 = vunpack.c.l.b16 %v431
        %v991 = vunpack.c.h.b16 %v431
        %v992 = vunpack.c.l.b16 %v432
        %v993 = vunpack.c.h.b16 %v432
        %v994 = vunpack.c.l.b16 %v433
        %v995 = vunpack.c.h.b16 %v433
        %v996 = vunpack.c.l.b16 %v434
        %v997 = vunpack.c.h.b16 %v434
        %v998 = vunpack.c.l.b16 %v435
        %v999 = vunpack.c.h.b16 %v435
        %v1000 = vunpack.c.l.b16 %v436
        %v1001 = vunpack.c.h.b16 %v436
        %v1002 = vunpack.c.l.b16 %v437
        %v1003 = vunpack.c.h.b16 %v437
        %v1004 = vunpack.c.l.b16 %v438
        %v1005 = vunpack.c.h.b16 %v438
        %v1006 = vunpack.c.l.b16 %v439
        %v1007 = vunpack.c.h.b16 %v439
        %v1008 = vunpack.c.l.b16 %v440
        %v1009 = vunpack.c.h.b16 %v440
        %v1010 = vunpack.c.l.b16 %v441
        %v1011 = vunpack.c.h.b16 %v441
        %v1012 = vunpack.c.l.b16 %v442
        %v1013 = vunpack.c.h.b16 %v442
        %v1014 = vunpack.c.l.b16 %v443
        %v1015 = vunpack.c.h.b16 %v443
        %v1016 = vunpack.c.l.b16 %v444
        %v1017 = vunpack.c.h.b16 %v444
        %v1018 = vunpack.c.l.b16 %v445
        %v1019 = vunpack.c.h.b16 %v445
        %v1020 = vunpack.c.l.b16 %v446
        %v1021 = vunpack.c.h.b16 %v446
        %v1022 = vunpack.c.l.b16 %v447
        %v1023 = vunpack.c.h.b16 %v447
        %v1024 = vunpack.c.l.b16 %v448
        %v1025 = vunpack.c.h.b16 %v448
        %v1026 = vunpack.c.l.b16 %v449
        %v1027 = vunpack.c.h.b16 %v449
        %v1028 = vunpack.c.l.b16 %v450
        %v1029 = vunpack.c.h.b16 %v450
        %v1030 = vunpack.c.l.b16 %v451
        %v1031 = vunpack.c.h.b16 %v451
        %v1032 = vunpack.c.l.b16 %v452
        %v1033 = vunpack.c.h.b16 %v452
        %v1034 = vunpack.c.l.b16 %v453
        %v1035 = vunpack.c.h.b16 %v453
        %v1036 = vunpack.c.l.b16 %v454
        %v1037 = vunpack.c.h.b16 %v454
        %v1038 = vunpack.c.l.b16 %v455
        %v1039 = vunpack.c.h.b16 %v455
        %v1040 = vunpack.c.l.b16 %v456
        %v1041 = vunpack.c.h.b16 %v456
        %v1042 = vunpack.c.l.b16 %v457
        %v1043 = vunpack.c.h.b16 %v457
        %v1044 = vunpack.c.l.b16 %v458
        %v1045 = vunpack.c.h.b16 %v458
        %v1046 = vunpack.c.l.b16 %v459
        %v1047 = vunpack.c.h.b16 %v459
        %v1048 = vunpack.c.l.b16 %v460
        %v1049 = vunpack.c.h.b16 %v460
        %v1050 = vunpack.c.l.b16 %v461
        %v1051 = vunpack.c.h.b16 %v461
        %v1052 = vunpack.c.l.b16 %v462
        %v1053 = vunpack.c.h.b16 %v462
        %v1054 = vunpack.c.l.b16 %v463
        %v1055 = vunpack.c.h.b16 %v463
        %v1056 = vunpack.c.l.b16 %v464
        %v1057 = vunpack.c.h.b16 %v464
        %v1058 = vunpack.c.l.b16 %v465
        %v1059 = vunpack.c.h.b16 %v465
        %v1060 = vunpack.c.l.b16 %v466
        %v1061 = vunpack.c.h.b16 %v466
        %v1062 = vunpack.c.l.b16 %v467
        %v1063 = vunpack.c.h.b16 %v467
        %v1064 = vunpack.c.l.b16 %v468
        %v1065 = vunpack.c.h.b16 %v468
        %v1066 = vunpack.c.l.b16 %v469
        %v1067 = vunpack.c.h.b16 %v469
        %v1068 = vunpack.c.l.b16 %v470
        %v1069 = vunpack.c.h.b16 %v470
        %v1070 = vunpack.c.l.b16 %v471
        %v1071 = vunpack.c.h.b16 %v471
        %v1072 = vunpack.c.l.b16 %v472
        %v1073 = vunpack.c.h.b16 %v472
        %v1074 = vunpack.c.l.b16 %v473
        %v1075 = vunpack.c.h.b16 %v473
        %v1076 = vunpack.c.l.b16 %v474
        %v1077 = vunpack.c.h.b16 %v474
        %v1078 = vunpack.c.l.b16 %v475
        %v1079 = vunpack.c.h.b16 %v475
        %v1080 = vunpack.c.l.b16 %v476
        %v1081 = vunpack.c.h.b16 %v476
        %v1082 = vunpack.c.l.b16 %v477
        %v1083 = vunpack.c.h.b16 %v477
        %v1084 = vunpack.c.l.b16 %v478
        %v1085 = vunpack.c.h.b16 %v478
        %v1086 = vpack.c.b16 %v706, %v702
        %v1087 = vpack.c.b16 %v707, %v703
        %v1088 = vpack.c.b16 %v708, %v704
        %v1089 = vpack.c.b16 %v709, %v705
        %v1090 = vpack.c.b16 %v714, %v710
        %v1091 = vpack.c.b16 %v715, %v711
        %v1092 = vpack.c.b16 %v716, %v712
        %v1093 = vpack.c.b16 %v717, %v713
        %v1094 = vpack.c.b16 %v722, %v718
        %v1095 = vpack.c.b16 %v723, %v719
        %v1096 = vpack.c.b16 %v724, %v720
        %v1097 = vpack.c.b16 %v725, %v721
        %v1098 = vpack.c.b16 %v730, %v726
        %v1099 = vpack.c.b16 %v731, %v727
        %v1100 = vpack.c.b16 %v732, %v728
        %v1101 = vpack.c.b16 %v733, %v729
        %v1102 = vpack.c.b16 %v738, %v734
        %v1103 = vpack.c.b16 %v739, %v735
        %v1104 = vpack.c.b16 %v740, %v736
        %v1105 = vpack.c.b16 %v741, %v737
        %v1106 = vpack.c.b16 %v746, %v742
        %v1107 = vpack.c.b16 %v747, %v743
        %v1108 = vpack.c.b16 %v748, %v744
        %v1109 = vpack.c.b16 %v749, %v745
        %v1110 = vpack.c.b16 %v754, %v750
        %v1111 = vpack.c.b16 %v755, %v751
        %v1112 = vpack.c.b16 %v756, %v752
        %v1113 = vpack.c.b16 %v757, %v753
        %v1114 = vpack.c.b16 %v762, %v758
        %v1115 = vpack.c.b16 %v763, %v759
        %v1116 = vpack.c.b16 %v764, %v760
        %v1117 = vpack.c.b16 %v765, %v761
        %v1118 = vpack.c.b16 %v770, %v766
        %v1119 = vpack.c.b16 %v771, %v767
        %v1120 = vpack.c.b16 %v772, %v768
        %v1121 = vpack.c.b16 %v773, %v769
        %v1122 = vpack.c.b16 %v778, %v774
        %v1123 = vpack.c.b16 %v779, %v775
        %v1124 = vpack.c.b16 %v780, %v776
        %v1125 = vpack.c.b16 %v781, %v777
        %v1126 = vpack.c.b16 %v786, %v782
        %v1127 = vpack.c.b16 %v787, %v783
        %v1128 = vpack.c.b16 %v788, %v784
        %v1129 = vpack.c.b16 %v789, %v785
        %v1130 = vpack.c.b16 %v794, %v790
        %v1131 = vpack.c.b16 %v795, %v791
        %v1132 = vpack.c.b16 %v796, %v792
        %v1133 = vpack.c.b16 %v797, %v793
        %v1134 = vpack.c.b16 %v802, %v798
        %v1135 = vpack.c.b16 %v803, %v799
        %v1136 = vpack.c.b16 %v804, %v800
        %v1137 = vpack.c.b16 %v805, %v801
        %v1138 = vpack.c.b16 %v810, %v806
        %v1139 = vpack.c.b16 %v811, %v807
        %v1140 = vpack.c.b16 %v812, %v808
        %v1141 = vpack.c.b16 %v813, %v809
        %v1142 = vpack.c.b16 %v818, %v814
        %v1143 = vpack.c.b16 %v819, %v815
        %v1144 = vpack.c.b16 %v820, %v816
        %v1145 = vpack.c.b16 %v821, %v817
        %v1146 = vpack.c.b16 %v826, %v822
        %v1147 = vpack.c.b16 %v827, %v823
        %v1148 = vpack.c.b16 %v828, %v824
        %v1149 = vpack.c.b16 %v829, %v825
        %v1150 = vpack.c.b16 %v834, %v830
        %v1151 = vpack.c.b16 %v835, %v831
        %v1152 = vpack.c.b16 %v836, %v832
        %v1153 = vpack.c.b16 %v837, %v833
        %v1154 = vpack.c.b16 %v842, %v838
        %v1155 = vpack.c.b16 %v843, %v839
        %v1156 = vpack.c.b16 %v844, %v840
        %v1157 = vpack.c.b16 %v845, %v841
        %v1158 = vpack.c.b16 %v850, %v846
        %v1159 = vpack.c.b16 %v851, %v847
        %v1160 = vpack.c.b16 %v852, %v848
        %v1161 = vpack.c.b16 %v853, %v849
        %v1162 = vpack.c.b16 %v858, %v854
        %v1163 = vpack.c.b16 %v859, %v855
        %v1164 = vpack.c.b16 %v860, %v856
        %v1165 = vpack.c.b16 %v861, %v857
        %v1166 = vpack.c.b16 %v866, %v862
        %v1167 = vpack.c.b16 %v867, %v863
        %v1168 = vpack.c.b16 %v868, %v864
        %v1169 = vpack.c.b16 %v869, %v865
        %v1170 = vpack.c.b16 %v874, %v870
        %v1171 = vpack.c.b16 %v875, %v871
        %v1172 = vpack.c.b16 %v876, %v872
        %v1173 = vpack.c.b16 %v877, %v873
        %v1174 = vpack.c.b16 %v882, %v878
        %v1175 = vpack.c.b16 %v883, %v879
        %v1176 = vpack.c.b16 %v884, %v880
        %v1177 = vpack.c.b16 %v885, %v881
        %v1178 = vpack.c.b16 %v890, %v886
        %v1179 = vpack.c.b16 %v891, %v887
        %v1180 = vpack.c.b16 %v892, %v888
        %v1181 = vpack.c.b16 %v893, %v889
        %v1182 = vpack.c.b16 %v898, %v894
        %v1183 = vpack.c.b16 %v899, %v895
        %v1184 = vpack.c.b16 %v900, %v896
        %v1185 = vpack.c.b16 %v901, %v897
        %v1186 = vpack.c.b16 %v906, %v902
        %v1187 = vpack.c.b16 %v907, %v903
        %v1188 = vpack.c.b16 %v908, %v904
        %v1189 = vpack.c.b16 %v909, %v905
        %v1190 = vpack.c.b16 %v914, %v910
        %v1191 = vpack.c.b16 %v915, %v911
        %v1192 = vpack.c.b16 %v916, %v912
        %v1193 = vpack.c.b16 %v917, %v913
        %v1194 = vpack.c.b16 %v922, %v918
        %v1195 = vpack.c.b16 %v923, %v919
        %v1196 = vpack.c.b16 %v924, %v920
        %v1197 = vpack.c.b16 %v925, %v921
        %v1198 = vpack.c.b16 %v930, %v926
        %v1199 = vpack.c.b16 %v931, %v927
        %v1200 = vpack.c.b16 %v932, %v928
        %v1201 = vpack.c.b16 %v933, %v929
        %v1202 = vpack.c.b16 %v938, %v934
        %v1203 = vpack.c.b16 %v939, %v935
        %v1204 = vpack.c.b16 %v940, %v936
        %v1205 = vpack.c.b16 %v941, %v937
        %v1206 = vpack.c.b16 %v946, %v942
        %v1207 = vpack.c.b16 %v947, %v943
        %v1208 = vpack.c.b16 %v948, %v944
        %v1209 = vpack.c.b16 %v949, %v945
        %v1210 = vpack.c.b16 %v954, %v950
        %v1211 = vpack.c.b16 %v955, %v951
        %v1212 = vpack.c.b16 %v956, %v952
        %v1213 = vpack.c.b16 %v957, %v953
        %v1214 = vpack.c.b16 %v962, %v958
        %v1215 = vpack.c.b16 %v963, %v959
        %v1216 = vpack.c.b16 %v964, %v960
        %v1217 = vpack.c.b16 %v965, %v961
        %v1218 = vpack.c.b16 %v970, %v966
        %v1219 = vpack.c.b16 %v971, %v967
        %v1220 = vpack.c.b16 %v972, %v968
        %v1221 = vpack.c.b16 %v973, %v969
        %v1222 = vpack.c.b16 %v978, %v974
        %v1223 = vpack.c.b16 %v979, %v975
        %v1224 = vpack.c.b16 %v980, %v976
        %v1225 = vpack.c.b16 %v981, %v977
        %v1226 = vpack.c.b16 %v986, %v982
        %v1227 = vpack.c.b16 %v987, %v983
        %v1228 = vpack.c.b16 %v988, %v984
        %v1229 = vpack.c.b16 %v989, %v985
        %v1230 = vpack.c.b16 %v994, %v990
        %v1231 = vpack.c.b16 %v995, %v991
        %v1232 = vpack.c.b16 %v996, %v992
        %v1233 = vpack.c.b16 %v997, %v993
        %v1234 = vpack.c.b16 %v1002, %v998
        %v1235 = vpack.c.b16 %v1003, %v999
        %v1236 = vpack.c.b16 %v1004, %v1000
        %v1237 = vpack.c.b16 %v1005, %v1001
        %v1238 = vpack.c.b16 %v1010, %v1006
        %v1239 = vpack.c.b16 %v1011, %v1007
        %v1240 = vpack.c.b16 %v1012, %v1008
        %v1241 = vpack.c.b16 %v1013, %v1009
        %v1242 = vpack.c.b16 %v1018, %v1014
        %v1243 = vpack.c.b16 %v1019, %v1015
        %v1244 = vpack.c.b16 %v1020, %v1016
        %v1245 = vpack.c.b16 %v1021, %v1017
        %v1246 = vpack.c.b16 %v1026, %v1022
        %v1247 = vpack.c.b16 %v1027, %v1023
        %v1248 = vpack.c.b16 %v1028, %v1024
        %v1249 = vpack.c.b16 %v1029, %v1025
        %v1250 = vpack.c.b16 %v1034, %v1030
        %v1251 = vpack.c.b16 %v1035, %v1031
        %v1252 = vpack.c.b16 %v1036, %v1032
        %v1253 = vpack.c.b16 %v1037, %v1033
        %v1254 = vpack.c.b16 %v1042, %v1038
        %v1255 = vpack.c.b16 %v1043, %v1039
        %v1256 = vpack.c.b16 %v1044, %v1040
        %v1257 = vpack.c.b16 %v1045, %v1041
        %v1258 = vpack.c.b16 %v1050, %v1046
        %v1259 = vpack.c.b16 %v1051, %v1047
        %v1260 = vpack.c.b16 %v1052, %v1048
        %v1261 = vpack.c.b16 %v1053, %v1049
        %v1262 = vpack.c.b16 %v1058, %v1054
        %v1263 = vpack.c.b16 %v1059, %v1055
        %v1264 = vpack.c.b16 %v1060, %v1056
        %v1265 = vpack.c.b16 %v1061, %v1057
        %v1266 = vpack.c.b16 %v1066, %v1062
        %v1267 = vpack.c.b16 %v1067, %v1063
        %v1268 = vpack.c.b16 %v1068, %v1064
        %v1269 = vpack.c.b16 %v1069, %v1065
        %v1270 = vpack.c.b16 %v1074, %v1070
        %v1271 = vpack.c.b16 %v1075, %v1071
        %v1272 = vpack.c.b16 %v1076, %v1072
        %v1273 = vpack.c.b16 %v1077, %v1073
        %v1274 = vpack.c.b16 %v1082, %v1078
        %v1275 = vpack.c.b16 %v1083, %v1079
        %v1276 = vpack.c.b16 %v1084, %v1080
        %v1277 = vpack.c.b16 %v1085, %v1081
        %1470 = vmatpush.bf16.msra.mxu0 %v1114
        %1471 = vmatpush.bf16.msra.mxu0 %v1110
        %1472 = vmatpush.bf16.msra.mxu0 %v1106
        %1473 = vmatpush.bf16.msra.mxu0 %v1102
        %1474 = vmatpush.bf16.msra.mxu0 %v1098
        %1475 = vmatpush.bf16.msra.mxu0 %v1094
        %1476 = vmatpush.bf16.msra.mxu0 %v1090
        %1477 = vmatpush.bf16.msra.mxu0 %v1086
        %1478 = vmatmul.bf16.gmra.mxu0 %v498
        %v1479 = vpop.f32.mrf.mxu0
        %v1480 = vadd.f32 %v481, %v1479
        %v1481 = vpop.f32.mrf.mxu0
        %1482 = vdwg.mxu0
        %1483 = vmatpush.bf16.msra.mxu0 %v1146
        %1484 = vmatpush.bf16.msra.mxu0 %v1142
        %1485 = vmatpush.bf16.msra.mxu0 %v1138
        %1486 = vmatpush.bf16.msra.mxu0 %v1134
        %1487 = vmatpush.bf16.msra.mxu0 %v1130
        %1488 = vmatpush.bf16.msra.mxu0 %v1126
        %1489 = vmatpush.bf16.msra.mxu0 %v1122
        %1490 = vmatpush.bf16.msra.mxu0 %v1118
        %1491 = vmatmul.bf16.gmra.mxu0 %v499
        %v1492 = vpop.f32.mrf.mxu0
        %v1493 = vadd.f32 %v1480, %v1492
        %v1494 = vpop.f32.mrf.mxu0
        %1495 = vdwg.mxu0
        %1496 = vmatpush.bf16.msra.mxu0 %v1178
        %1497 = vmatpush.bf16.msra.mxu0 %v1174
        %1498 = vmatpush.bf16.msra.mxu0 %v1170
        %1499 = vmatpush.bf16.msra.mxu0 %v1166
        %1500 = vmatpush.bf16.msra.mxu0 %v1162
        %1501 = vmatpush.bf16.msra.mxu0 %v1158
        %1502 = vmatpush.bf16.msra.mxu0 %v1154
        %1503 = vmatpush.bf16.msra.mxu0 %v1150
        %1504 = vmatmul.bf16.gmra.mxu0 %v500
        %v1505 = vpop.f32.mrf.mxu0
        %v1506 = vadd.f32 %v1493, %v1505
        %v1507 = vpop.f32.mrf.mxu0
        %1508 = vdwg.mxu0
        %1509 = vmatpush.bf16.msra.mxu0 %v1210
        %1510 = vmatpush.bf16.msra.mxu0 %v1206
        %1511 = vmatpush.bf16.msra.mxu0 %v1202
        %1512 = vmatpush.bf16.msra.mxu0 %v1198
        %1513 = vmatpush.bf16.msra.mxu0 %v1194
        %1514 = vmatpush.bf16.msra.mxu0 %v1190
        %1515 = vmatpush.bf16.msra.mxu0 %v1186
        %1516 = vmatpush.bf16.msra.mxu0 %v1182
        %1517 = vmatmul.bf16.gmra.mxu0 %v501
        %v1518 = vpop.f32.mrf.mxu0
        %v1519 = vadd.f32 %v1506, %v1518
        %v1520 = vpop.f32.mrf.mxu0
        %1521 = vdwg.mxu0
        %1522 = vmatpush.bf16.msra.mxu0 %v1242
        %1523 = vmatpush.bf16.msra.mxu0 %v1238
        %1524 = vmatpush.bf16.msra.mxu0 %v1234
        %1525 = vmatpush.bf16.msra.mxu0 %v1230
        %1526 = vmatpush.bf16.msra.mxu0 %v1226
        %1527 = vmatpush.bf16.msra.mxu0 %v1222
        %1528 = vmatpush.bf16.msra.mxu0 %v1218
        %1529 = vmatpush.bf16.msra.mxu0 %v1214
        %1530 = vmatmul.bf16.gmra.mxu0 %v502
        %v1531 = vpop.f32.mrf.mxu0
        %v1532 = vadd.f32 %v1519, %v1531
        %v1533 = vpop.f32.mrf.mxu0
        %1534 = vdwg.mxu0
        %1535 = vmatpush.bf16.msra.mxu0 %v1274
        %1536 = vmatpush.bf16.msra.mxu0 %v1270
        %1537 = vmatpush.bf16.msra.mxu0 %v1266
        %1538 = vmatpush.bf16.msra.mxu0 %v1262
        %1539 = vmatpush.bf16.msra.mxu0 %v1258
        %1540 = vmatpush.bf16.msra.mxu0 %v1254
        %1541 = vmatpush.bf16.msra.mxu0 %v1250
        %1542 = vmatpush.bf16.msra.mxu0 %v1246
        %1543 = vmatmul.bf16.gmra.mxu0 %v503
        %v1544 = vpop.f32.mrf.mxu0
        %v1545 = vadd.f32 %v1532, %v1544
        %v1546 = vpop.f32.mrf.mxu0
        %1547 = vdwg.mxu0
        %1548 = vmatpush.bf16.msra.mxu0 %v1115
        %1549 = vmatpush.bf16.msra.mxu0 %v1111
        %1550 = vmatpush.bf16.msra.mxu0 %v1107
        %1551 = vmatpush.bf16.msra.mxu0 %v1103
        %1552 = vmatpush.bf16.msra.mxu0 %v1099
        %1553 = vmatpush.bf16.msra.mxu0 %v1095
        %1554 = vmatpush.bf16.msra.mxu0 %v1091
        %1555 = vmatpush.bf16.msra.mxu0 %v1087
        %1556 = vmatmul.bf16.gmra.mxu0 %v498
        %v1557 = vpop.f32.mrf.mxu0
        %v1558 = vadd.f32 %v482, %v1557
        %v1559 = vpop.f32.mrf.mxu0
        %1560 = vdwg.mxu0
        %1561 = vmatpush.bf16.msra.mxu0 %v1147
        %1562 = vmatpush.bf16.msra.mxu0 %v1143
        %1563 = vmatpush.bf16.msra.mxu0 %v1139
        %1564 = vmatpush.bf16.msra.mxu0 %v1135
        %1565 = vmatpush.bf16.msra.mxu0 %v1131
        %1566 = vmatpush.bf16.msra.mxu0 %v1127
        %1567 = vmatpush.bf16.msra.mxu0 %v1123
        %1568 = vmatpush.bf16.msra.mxu0 %v1119
        %1569 = vmatmul.bf16.gmra.mxu0 %v499
        %v1570 = vpop.f32.mrf.mxu0
        %v1571 = vadd.f32 %v1558, %v1570
        %v1572 = vpop.f32.mrf.mxu0
        %1573 = vdwg.mxu0
        %1574 = vmatpush.bf16.msra.mxu0 %v1179
        %1575 = vmatpush.bf16.msra.mxu0 %v1175
        %1576 = vmatpush.bf16.msra.mxu0 %v1171
        %1577 = vmatpush.bf16.msra.mxu0 %v1167
        %1578 = vmatpush.bf16.msra.mxu0 %v1163
        %1579 = vmatpush.bf16.msra.mxu0 %v1159
        %1580 = vmatpush.bf16.msra.mxu0 %v1155
        %1581 = vmatpush.bf16.msra.mxu0 %v1151
        %1582 = vmatmul.bf16.gmra.mxu0 %v500
        %v1583 = vpop.f32.mrf.mxu0
        %v1584 = vadd.f32 %v1571, %v1583
        %v1585 = vpop.f32.mrf.mxu0
        %1586 = vdwg.mxu0
        %1587 = vmatpush.bf16.msra.mxu0 %v1211
        %1588 = vmatpush.bf16.msra.mxu0 %v1207
        %1589 = vmatpush.bf16.msra.mxu0 %v1203
        %1590 = vmatpush.bf16.msra.mxu0 %v1199
        %1591 = vmatpush.bf16.msra.mxu0 %v1195
        %1592 = vmatpush.bf16.msra.mxu0 %v1191
        %1593 = vmatpush.bf16.msra.mxu0 %v1187
        %1594 = vmatpush.bf16.msra.mxu0 %v1183
        %1595 = vmatmul.bf16.gmra.mxu0 %v501
        %v1596 = vpop.f32.mrf.mxu0
        %v1597 = vadd.f32 %v1584, %v1596
        %v1598 = vpop.f32.mrf.mxu0
        %1599 = vdwg.mxu0
        %1600 = vmatpush.bf16.msra.mxu0 %v1243
        %1601 = vmatpush.bf16.msra.mxu0 %v1239
        %1602 = vmatpush.bf16.msra.mxu0 %v1235
        %1603 = vmatpush.bf16.msra.mxu0 %v1231
        %1604 = vmatpush.bf16.msra.mxu0 %v1227
        %1605 = vmatpush.bf16.msra.mxu0 %v1223
        %1606 = vmatpush.bf16.msra.mxu0 %v1219
        %1607 = vmatpush.bf16.msra.mxu0 %v1215
        %1608 = vmatmul.bf16.gmra.mxu0 %v502
        %v1609 = vpop.f32.mrf.mxu0
        %v1610 = vadd.f32 %v1597, %v1609
        %v1611 = vpop.f32.mrf.mxu0
        %1612 = vdwg.mxu0
        %1613 = vmatpush.bf16.msra.mxu0 %v1275
        %1614 = vmatpush.bf16.msra.mxu0 %v1271
        %1615 = vmatpush.bf16.msra.mxu0 %v1267
        %1616 = vmatpush.bf16.msra.mxu0 %v1263
        %1617 = vmatpush.bf16.msra.mxu0 %v1259
        %1618 = vmatpush.bf16.msra.mxu0 %v1255
        %1619 = vmatpush.bf16.msra.mxu0 %v1251
        %1620 = vmatpush.bf16.msra.mxu0 %v1247
        %1621 = vmatmul.bf16.gmra.mxu0 %v503
        %v1622 = vpop.f32.mrf.mxu0
        %v1623 = vadd.f32 %v1610, %v1622
        %v1624 = vpop.f32.mrf.mxu0
        %1625 = vdwg.mxu0
        %1626 = vmatpush.bf16.msra.mxu0 %v1116
        %1627 = vmatpush.bf16.msra.mxu0 %v1112
        %1628 = vmatpush.bf16.msra.mxu0 %v1108
        %1629 = vmatpush.bf16.msra.mxu0 %v1104
        %1630 = vmatpush.bf16.msra.mxu0 %v1100
        %1631 = vmatpush.bf16.msra.mxu0 %v1096
        %1632 = vmatpush.bf16.msra.mxu0 %v1092
        %1633 = vmatpush.bf16.msra.mxu0 %v1088
        %1634 = vmatmul.bf16.gmra.mxu0 %v498
        %v1635 = vpop.f32.mrf.mxu0
        %v1636 = vadd.f32 %v483, %v1635
        %v1637 = vpop.f32.mrf.mxu0
        %1638 = vdwg.mxu0
        %1639 = vmatpush.bf16.msra.mxu0 %v1148
        %1640 = vmatpush.bf16.msra.mxu0 %v1144
        %1641 = vmatpush.bf16.msra.mxu0 %v1140
        %1642 = vmatpush.bf16.msra.mxu0 %v1136
        %1643 = vmatpush.bf16.msra.mxu0 %v1132
        %1644 = vmatpush.bf16.msra.mxu0 %v1128
        %1645 = vmatpush.bf16.msra.mxu0 %v1124
        %1646 = vmatpush.bf16.msra.mxu0 %v1120
        %1647 = vmatmul.bf16.gmra.mxu0 %v499
        %v1648 = vpop.f32.mrf.mxu0
        %v1649 = vadd.f32 %v1636, %v1648
        %v1650 = vpop.f32.mrf.mxu0
        %1651 = vdwg.mxu0
        %1652 = vmatpush.bf16.msra.mxu0 %v1180
        %1653 = vmatpush.bf16.msra.mxu0 %v1176
        %1654 = vmatpush.bf16.msra.mxu0 %v1172
        %1655 = vmatpush.bf16.msra.mxu0 %v1168
        %1656 = vmatpush.bf16.msra.mxu0 %v1164
        %1657 = vmatpush.bf16.msra.mxu0 %v1160
        %1658 = vmatpush.bf16.msra.mxu0 %v1156
        %1659 = vmatpush.bf16.msra.mxu0 %v1152
        %1660 = vmatmul.bf16.gmra.mxu0 %v500
        %v1661 = vpop.f32.mrf.mxu0
        %v1662 = vadd.f32 %v1649, %v1661
        %v1663 = vpop.f32.mrf.mxu0
        %1664 = vdwg.mxu0
        %1665 = vmatpush.bf16.msra.mxu0 %v1212
        %1666 = vmatpush.bf16.msra.mxu0 %v1208
        %1667 = vmatpush.bf16.msra.mxu0 %v1204
        %1668 = vmatpush.bf16.msra.mxu0 %v1200
        %1669 = vmatpush.bf16.msra.mxu0 %v1196
        %1670 = vmatpush.bf16.msra.mxu0 %v1192
        %1671 = vmatpush.bf16.msra.mxu0 %v1188
        %1672 = vmatpush.bf16.msra.mxu0 %v1184
        %1673 = vmatmul.bf16.gmra.mxu0 %v501
        %v1674 = vpop.f32.mrf.mxu0
        %v1675 = vadd.f32 %v1662, %v1674
        %v1676 = vpop.f32.mrf.mxu0
        %1677 = vdwg.mxu0
        %1678 = vmatpush.bf16.msra.mxu0 %v1244
        %1679 = vmatpush.bf16.msra.mxu0 %v1240
        %1680 = vmatpush.bf16.msra.mxu0 %v1236
        %1681 = vmatpush.bf16.msra.mxu0 %v1232
        %1682 = vmatpush.bf16.msra.mxu0 %v1228
        %1683 = vmatpush.bf16.msra.mxu0 %v1224
        %1684 = vmatpush.bf16.msra.mxu0 %v1220
        %1685 = vmatpush.bf16.msra.mxu0 %v1216
        %1686 = vmatmul.bf16.gmra.mxu0 %v502
        %v1687 = vpop.f32.mrf.mxu0
        %v1688 = vadd.f32 %v1675, %v1687
        %v1689 = vpop.f32.mrf.mxu0
        %1690 = vdwg.mxu0
        %1691 = vmatpush.bf16.msra.mxu0 %v1276
        %1692 = vmatpush.bf16.msra.mxu0 %v1272
        %1693 = vmatpush.bf16.msra.mxu0 %v1268
        %1694 = vmatpush.bf16.msra.mxu0 %v1264
        %1695 = vmatpush.bf16.msra.mxu0 %v1260
        %1696 = vmatpush.bf16.msra.mxu0 %v1256
        %1697 = vmatpush.bf16.msra.mxu0 %v1252
        %1698 = vmatpush.bf16.msra.mxu0 %v1248
        %1699 = vmatmul.bf16.gmra.mxu0 %v503
        %v1700 = vpop.f32.mrf.mxu0
        %v1701 = vadd.f32 %v1688, %v1700
        %v1702 = vpop.f32.mrf.mxu0
        %1703 = vdwg.mxu0
        %1704 = vmatpush.bf16.msra.mxu0 %v1117
        %1705 = vmatpush.bf16.msra.mxu0 %v1113
        %1706 = vmatpush.bf16.msra.mxu0 %v1109
        %1707 = vmatpush.bf16.msra.mxu0 %v1105
        %1708 = vmatpush.bf16.msra.mxu0 %v1101
        %1709 = vmatpush.bf16.msra.mxu0 %v1097
        %1710 = vmatpush.bf16.msra.mxu0 %v1093
        %1711 = vmatpush.bf16.msra.mxu0 %v1089
        %1712 = vmatmul.bf16.gmra.mxu0 %v498
        %v1713 = vpop.f32.mrf.mxu0
        %v1714 = vadd.f32 %v484, %v1713
        %v1715 = vpop.f32.mrf.mxu0
        %1716 = vdwg.mxu0
        %1717 = vmatpush.bf16.msra.mxu0 %v1149
        %1718 = vmatpush.bf16.msra.mxu0 %v1145
        %1719 = vmatpush.bf16.msra.mxu0 %v1141
        %1720 = vmatpush.bf16.msra.mxu0 %v1137
        %1721 = vmatpush.bf16.msra.mxu0 %v1133
        %1722 = vmatpush.bf16.msra.mxu0 %v1129
        %1723 = vmatpush.bf16.msra.mxu0 %v1125
        %1724 = vmatpush.bf16.msra.mxu0 %v1121
        %1725 = vmatmul.bf16.gmra.mxu0 %v499
        %v1726 = vpop.f32.mrf.mxu0
        %v1727 = vadd.f32 %v1714, %v1726
        %v1728 = vpop.f32.mrf.mxu0
        %1729 = vdwg.mxu0
        %1730 = vmatpush.bf16.msra.mxu0 %v1181
        %1731 = vmatpush.bf16.msra.mxu0 %v1177
        %1732 = vmatpush.bf16.msra.mxu0 %v1173
        %1733 = vmatpush.bf16.msra.mxu0 %v1169
        %1734 = vmatpush.bf16.msra.mxu0 %v1165
        %1735 = vmatpush.bf16.msra.mxu0 %v1161
        %1736 = vmatpush.bf16.msra.mxu0 %v1157
        %1737 = vmatpush.bf16.msra.mxu0 %v1153
        %1738 = vmatmul.bf16.gmra.mxu0 %v500
        %v1739 = vpop.f32.mrf.mxu0
        %v1740 = vadd.f32 %v1727, %v1739
        %v1741 = vpop.f32.mrf.mxu0
        %1742 = vdwg.mxu0
        %1743 = vmatpush.bf16.msra.mxu0 %v1213
        %1744 = vmatpush.bf16.msra.mxu0 %v1209
        %1745 = vmatpush.bf16.msra.mxu0 %v1205
        %1746 = vmatpush.bf16.msra.mxu0 %v1201
        %1747 = vmatpush.bf16.msra.mxu0 %v1197
        %1748 = vmatpush.bf16.msra.mxu0 %v1193
        %1749 = vmatpush.bf16.msra.mxu0 %v1189
        %1750 = vmatpush.bf16.msra.mxu0 %v1185
        %1751 = vmatmul.bf16.gmra.mxu0 %v501
        %v1752 = vpop.f32.mrf.mxu0
        %v1753 = vadd.f32 %v1740, %v1752
        %v1754 = vpop.f32.mrf.mxu0
        %1755 = vdwg.mxu0
        %1756 = vmatpush.bf16.msra.mxu0 %v1245
        %1757 = vmatpush.bf16.msra.mxu0 %v1241
        %1758 = vmatpush.bf16.msra.mxu0 %v1237
        %1759 = vmatpush.bf16.msra.mxu0 %v1233
        %1760 = vmatpush.bf16.msra.mxu0 %v1229
        %1761 = vmatpush.bf16.msra.mxu0 %v1225
        %1762 = vmatpush.bf16.msra.mxu0 %v1221
        %1763 = vmatpush.bf16.msra.mxu0 %v1217
        %1764 = vmatmul.bf16.gmra.mxu0 %v502
        %v1765 = vpop.f32.mrf.mxu0
        %v1766 = vadd.f32 %v1753, %v1765
        %v1767 = vpop.f32.mrf.mxu0
        %1768 = vdwg.mxu0
        %1769 = vmatpush.bf16.msra.mxu0 %v1277
        %1770 = vmatpush.bf16.msra.mxu0 %v1273
        %1771 = vmatpush.bf16.msra.mxu0 %v1269
        %1772 = vmatpush.bf16.msra.mxu0 %v1265
        %1773 = vmatpush.bf16.msra.mxu0 %v1261
        %1774 = vmatpush.bf16.msra.mxu0 %v1257
        %1775 = vmatpush.bf16.msra.mxu0 %v1253
        %1776 = vmatpush.bf16.msra.mxu0 %v1249
        %1777 = vmatmul.bf16.gmra.mxu0 %v503
        %v1778 = vpop.f32.mrf.mxu0
        %v1779 = vadd.f32 %v1766, %v1778
        %v1780 = vpop.f32.mrf.mxu0
        %1781 = vdwg.mxu0
        %v1782 = vmax.f32 %v1545, 0.0
        %v1783 = vmax.f32 %v1623, 0.0
        %v1784 = vmax.f32 %v1701, 0.0
        %v1785 = vmax.f32 %v1779, 0.0
        %v1786 = vpack.c.bf16 %v1783, %v1782
        %v1787 = vpack.c.bf16 %v1785, %v1784
        %1788 = vst [vmem:[%s272] sm:$0xff] %v1786
        %1789 = vst [vmem:[%s272 + $0x8] sm:$0xff] %v1787
        %vm1790 = vcmask 1043456
        %v1791 = vsel %vm1790, %v1782, 0.0
        %v1792 = vrot.slane %v1791, 4
        %v1793 = vadd.f32 %v1791, %v1792
        %v1794 = vrot.slane %v1793, 2
        %v1795 = vadd.f32 %v1793, %v1794
        %v1796 = vrot.slane %v1795, 1
        %v1797 = vadd.f32 %v1795, %v1796
        %v1798 = vsel %vm1790, %v1783, 0.0
        %v1799 = vrot.slane %v1798, 4
        %v1800 = vadd.f32 %v1798, %v1799
        %v1801 = vrot.slane %v1800, 2
        %v1802 = vadd.f32 %v1800, %v1801
        %v1803 = vrot.slane %v1802, 1
        %v1804 = vadd.f32 %v1802, %v1803
        %v1805 = vsel %vm1790, %v1784, 0.0
        %v1806 = vrot.slane %v1805, 4
        %v1807 = vadd.f32 %v1805, %v1806
        %v1808 = vrot.slane %v1807, 2
        %v1809 = vadd.f32 %v1807, %v1808
        %v1810 = vrot.slane %v1809, 1
        %v1811 = vadd.f32 %v1809, %v1810
        %v1812 = vsel %vm1790, %v1785, 0.0
        %v1813 = vrot.slane %v1812, 4
        %v1814 = vadd.f32 %v1812, %v1813
        %v1815 = vrot.slane %v1814, 2
        %v1816 = vadd.f32 %v1814, %v1815
        %v1817 = vrot.slane %v1816, 1
        %v1818 = vadd.f32 %v1816, %v1817
        %v1819 = vmul.f32 %v1797, 0.25
        %v1820 = vmul.f32 %v1804, 0.25
        %v1821 = vmul.f32 %v1811, 0.25
        %v1822 = vmul.f32 %v1818, 0.25
        %v1827 = vrot.slane %v1820, 7
        %v1828 = vrot.slane %v1821, 6
        %v1829 = vrot.slane %v1822, 5
        %vm1830 = vcmask 1040384
        %v1831 = vsel %vm1830, %v1819, %v1827
        %vm1832 = vcmask 1042434
        %v1833 = vsel %vm1832, %v1828, %v1829
        %vm1834 = vcmask 1041408
        %v1835 = vsel %vm1834, %v1831, %v1833
        %v1837 = vlaneseq
        %vm1838 = vcmp.ge.s32.totalorder %v1837, 0
        %vm1839 = vcmp.lt.s32.totalorder %v1837, 512
        %vm1840 = vmand %vm1838, %vm1839
        %1841 = vst.msk [vmem:[%s279] ss:$2 sm:$0xf] %vm1840, %v1835
        %v1846 = vrot.slane %v1782, 4
        %v1847 = vrot.slane %v1783, 4
        %v1848 = vrot.slane %v1784, 4
        %v1849 = vrot.slane %v1785, 4
        %v1854 = vsel %vm1790, %v1846, 0.0
        %v1855 = vrot.slane %v1854, 4
        %v1856 = vadd.f32 %v1854, %v1855
        %v1857 = vrot.slane %v1856, 2
        %v1858 = vadd.f32 %v1856, %v1857
        %v1859 = vrot.slane %v1858, 1
        %v1860 = vadd.f32 %v1858, %v1859
        %v1861 = vsel %vm1790, %v1847, 0.0
        %v1862 = vrot.slane %v1861, 4
        %v1863 = vadd.f32 %v1861, %v1862
        %v1864 = vrot.slane %v1863, 2
        %v1865 = vadd.f32 %v1863, %v1864
        %v1866 = vrot.slane %v1865, 1
        %v1867 = vadd.f32 %v1865, %v1866
        %v1868 = vsel %vm1790, %v1848, 0.0
        %v1869 = vrot.slane %v1868, 4
        %v1870 = vadd.f32 %v1868, %v1869
        %v1871 = vrot.slane %v1870, 2
        %v1872 = vadd.f32 %v1870, %v1871
        %v1873 = vrot.slane %v1872, 1
        %v1874 = vadd.f32 %v1872, %v1873
        %v1875 = vsel %vm1790, %v1849, 0.0
        %v1876 = vrot.slane %v1875, 4
        %v1877 = vadd.f32 %v1875, %v1876
        %v1878 = vrot.slane %v1877, 2
        %v1879 = vadd.f32 %v1877, %v1878
        %v1880 = vrot.slane %v1879, 1
        %v1881 = vadd.f32 %v1879, %v1880
        %v1882 = vmul.f32 %v1860, 0.25
        %v1883 = vmul.f32 %v1867, 0.25
        %v1884 = vmul.f32 %v1874, 0.25
        %v1885 = vmul.f32 %v1881, 0.25
        %v1890 = vrot.slane %v1883, 7
        %v1891 = vrot.slane %v1884, 6
        %v1892 = vrot.slane %v1885, 5
        %v1893 = vsel %vm1830, %v1882, %v1890
        %v1894 = vsel %vm1832, %v1891, %v1892
        %v1895 = vsel %vm1834, %v1893, %v1894
        %s1897 = scalar_lea.vmem %s279, 1 [#allocation9]
        %1898 = vst.msk [vmem:[%s1897] ss:$2 sm:$0xf] %vm1840, %v1895
        %s1899 = sand.u32 %s107, 1
        %s1900 = scalar_lea.sflag [#allocation4], %s1899
        %s1901 = sand.u32 %s107, 1
        %s1902 = smul.addr %s1901, 16
        %s1903 = scalar_lea.vmem [#allocation8], %s1902
        %s1904 = sand.u32 %s133, 1
        %s1905 = scalar_lea.sflag [#allocation10], %s1904
        %s1906 = sand.u32 %s133, 1
        %s1907 = smul.addr %s1906, 8
        %s1908 = scalar_lea.vmem [#allocation9], %s1907
        // Predicated region
        $region45: #{tpu_custom_call.1} parent=31 // pred_check
          %p1909 = pneg %p117
        $region46: #{tpu_custom_call.1} parent=31 // pred_check_branch
          %1911 = sbr.rel (%p1909) target = $region48
        $region47: #{tpu_custom_call.1} parent=31 // pred_region
          %s1912 = smul.u32 4, %s26
          %1914 = vsyncadd %s1900, 0
          %s1915 = smul.addr %s1912, 4
          %s1916 = scalar_lea.hbm %s3, %s1915
          %s1918 = sshll.u32 %s1903, 4
          %s1919 = int_to_ptr.vmem [resolvable:$true] %s1918
          %s1920 = sshll.u32 %s1916, 4
          %s1921 = int_to_ptr.hbm [resolvable:$true] %s1920
          %1923 = dma.vmem_to_hbm [thread:$0]  %s1919, 256, %s1921, %s1900
        $region48: #{tpu_custom_call.1} parent=31 // pred_fallthru
          _
        // Predicated region
        $region49: #{tpu_custom_call.1} parent=31 // pred_check
          %p1924 = pneg %p143
        $region50: #{tpu_custom_call.1} parent=31 // pred_check_branch
          %1926 = sbr.rel (%p1924) target = $region52
        $region51: #{tpu_custom_call.1} parent=31 // pred_region
          %s1927 = smul.u32 4, %s26
          %1929 = vsyncadd %s1905, 0
          %s1930 = smul.addr %s1927, 2
          %s1931 = scalar_lea.hbm %s4, %s1930
          %s1933 = sshll.u32 %s1908, 4
          %s1934 = int_to_ptr.vmem [resolvable:$true] %s1933
          %s1935 = sshll.u32 %s1931, 4
          %s1936 = int_to_ptr.hbm [resolvable:$true] %s1935
          %1938 = dma.vmem_to_hbm [thread:$0]  %s1934, 128, %s1936, %s1905
        $region52: #{tpu_custom_call.1} parent=31 // pred_fallthru
          _
      $region32: #{tpu_custom_call.1} parent=5 // pred_fallthru
        _
      %p1939 = scmp.le.s32.totalorder 2, %s21
      // Predicated region
      $region53: #{tpu_custom_call.1} parent=5 // pred_check
        %p1940 = pneg %p1939
      $region54: #{tpu_custom_call.1} parent=5 // pred_check_branch
        %1942 = sbr.rel (%p1940) target = $region56
      $region55: #{tpu_custom_call.1} parent=5 // pred_region
        %s1943 = ssub.s32 %s21, 2
        // Predicated region
        $region57: #{tpu_custom_call.1} parent=55 // pred_check
          %p1944 = pneg %p123
        $region58: #{tpu_custom_call.1} parent=55 // pred_check_branch
          %1946 = sbr.rel (%p1944) target = $region60
        $region59: #{tpu_custom_call.1} parent=55 // pred_region
          %s1947 = sand.u32 %s108, 1
          %s1948 = scalar_lea.sflag [#allocation4], %s1947
          %s1949 = sand.u32 %s108, 1
          %s1950 = smul.addr %s1949, 16
          %s1951 = scalar_lea.vmem [#allocation8], %s1950
          %1953 = dma.done %s1948, 256
        $region60: #{tpu_custom_call.1} parent=55 // pred_fallthru
          _
        // Predicated region
        $region61: #{tpu_custom_call.1} parent=55 // pred_check
          %p1954 = pneg %p149
        $region62: #{tpu_custom_call.1} parent=55 // pred_check_branch
          %1956 = sbr.rel (%p1954) target = $region64
        $region63: #{tpu_custom_call.1} parent=55 // pred_region
          %s1957 = sand.u32 %s134, 1
          %s1958 = scalar_lea.sflag [#allocation10], %s1957
          %s1959 = sand.u32 %s134, 1
          %s1960 = smul.addr %s1959, 8
          %s1961 = scalar_lea.vmem [#allocation9], %s1960
          %1963 = dma.done %s1958, 128
        $region64: #{tpu_custom_call.1} parent=55 // pred_fallthru
          _
      $region56: #{tpu_custom_call.1} parent=5 // pred_fallthru
        _
    $region6: #{tpu_custom_call.1} parent=1 // loop_footer
      %s25 = sadd.s32 1, %s21
    $region7: #{tpu_custom_call.1} parent=1 // loop_footer_branch
      %20 = sbr.rel target = $region3
    $region8: #{tpu_custom_call.1} parent=1 // loop_exit
      _
    %1964 = vsyncpa [#allocation3], 1
    %s1965 = scalar_lea.sflag [#allocation3], 1
    %1966 = vsyncpa %s1965, 1
    %1967 = vsyncpa [#allocation6], 1
    %s1968 = scalar_lea.sflag [#allocation6], 1
    %1969 = vsyncpa %s1968, 1
    %1970 = vsyncpa [#allocation4], 1
    %s1971 = scalar_lea.sflag [#allocation4], 1
    %1972 = vsyncpa %s1971, 1
    %1973 = vsyncpa [#allocation10], 1
    %s1974 = scalar_lea.sflag [#allocation10], 1
    %1975 = vsyncpa %s1974, 1

</llo_original>
